<compile_context>
chip_gen: v6e
topology: v6e:2x2x1
jax: 0.10.0
libtpu: 0.0.40
codegen_flags: <defaults>
</compile_context>

<pallas_src>
import math

import jax
import jax.numpy as jnp
from jax.experimental import pallas as pl
from jax.experimental.pallas import tpu as pltpu

HIDDEN = 128
HIDDEN4 = 1000        # PyTorch layer-4 width
HIDDEN4_PAD = 1024    # zero-padded to a lane multiple (numerically exact)
LANE = 128
ROW_ALIGN = 16        # batch-tile row granularity (bf16 sublane-pair friendly)
_INV_SQRT2 = 1.0 / math.sqrt(2.0)


def _round_up(n, m):
    return ((n + m - 1) // m) * m


def _cdiv(a, b):
    return -(-a // b)


def _gelu_exact(x):
    # PyTorch nn.GELU(approximate='none'): 0.5 * x * (1 + erf(x / sqrt(2)))
    return 0.5 * x * (1.0 + jax.lax.erf(x * _INV_SQRT2))


def mlp_kernel(x_ref,
               w1_ref, b1_ref, w2_ref, b2_ref, w3_ref, b3_ref,
               w4_ref, b4_ref, w5_ref, b5_ref,
               o_ref):
    # bf16 operands feed the MXU at native rate; accumulate in f32, add biases and
    # apply exact GELU in f32, then re-quantize to bf16 for the next matmul.
    h = jnp.dot(x_ref[...], w1_ref[...], preferred_element_type=jnp.float32) + b1_ref[...]
    h = _gelu_exact(h).astype(jnp.bfloat16)
    h = jnp.dot(h, w2_ref[...], preferred_element_type=jnp.float32) + b2_ref[...]
    h = _gelu_exact(h).astype(jnp.bfloat16)
    h = jnp.dot(h, w3_ref[...], preferred_element_type=jnp.float32) + b3_ref[...]
    h = _gelu_exact(h).astype(jnp.bfloat16)
    h = jnp.dot(h, w4_ref[...], preferred_element_type=jnp.float32) + b4_ref[...]
    h = _gelu_exact(h).astype(jnp.bfloat16)
    h = jnp.dot(h, w5_ref[...], preferred_element_type=jnp.float32) + b5_ref[...]
    o_ref[...] = h.astype(o_ref.dtype)


def prepare_params(params):
    """One-time preparation: zero-pad ragged dims, cast matmul operands to bf16.

    params: list of 5 (W_(in,out) f32, b_(1,out) f32) pairs.
    Returns (flat_params, meta) with meta = (D, D_pad, out_dim, out_pad).
    All padding is numerically exact (padded weights/biases are zero, GELU(0)=0).
    """
    (w1, b1), (w2, b2), (w3, b3), (w4, b4), (w5, b5) = params
    D = int(w1.shape[0])
    out_dim = int(w5.shape[1])
    D_pad = _round_up(D, LANE)
    out_pad = _round_up(out_dim, LANE)

    w1p = jnp.zeros((D_pad, HIDDEN), w1.dtype).at[:D].set(w1)
    w4p = jnp.zeros((HIDDEN, HIDDEN4_PAD), w4.dtype).at[:, :HIDDEN4].set(w4)
    b4p = jnp.zeros((1, HIDDEN4_PAD), b4.dtype).at[:, :HIDDEN4].set(b4)
    w5p = jnp.zeros((HIDDEN4_PAD, out_pad), w5.dtype).at[:HIDDEN4, :out_dim].set(w5)
    b5p = jnp.zeros((1, out_pad), b5.dtype).at[:, :out_dim].set(b5)

    weights = [w.astype(jnp.bfloat16) for w in (w1p, w2, w3, w4p, w5p)]
    biases = [b1, b2, b3, b4p, b5p]          # biases stay f32
    flat = []
    for w, b in zip(weights, biases):
        flat += [w, b]
    # Materialize once so no padding/casting work leaks into the per-call path.
    flat = list(jax.block_until_ready(jax.device_put(tuple(flat))))
    return flat, (D, D_pad, out_dim, out_pad)


def _choose_batch_tile(B, tb_max):
    """Pick (rows_per_tile, padded_batch) minimizing padding waste."""
    grid = max(1, _cdiv(B, tb_max))
    # For large batches make sure there are >= 2 grid steps so the "parallel"
    # grid axis can shard across both v7x TensorCores (v5e/v6e are single-TC).
    if B >= 256 and grid < 2:
        grid = 2
    tb = _round_up(_cdiv(B, grid), ROW_ALIGN)
    return tb, grid * tb


def solver_forward(x, prepared, *, tb_max=512):
    """x: (B, input_size) f32. prepared: output of prepare_params()."""
    flat_params, (D, D_pad, out_dim, out_pad) = prepared
    B = x.shape[0]
    assert x.shape[1] == D, f"expected input_size={D}, got {x.shape[1]}"

    tb, B_pad = _choose_batch_tile(B, tb_max)

    # Per-call input prep only: zero-pad batch rows / feature lanes, cast once to bf16.
    if B_pad == B and D_pad == D:
        x_bf = x.astype(jnp.bfloat16)
    else:
        x_bf = (jnp.zeros((B_pad, D_pad), jnp.bfloat16)
                .at[:B, :D].set(x.astype(jnp.bfloat16)))

    def _resident(arr):
        # Weight/bias tiles equal the full array -> resident across all grid steps.
        return pl.BlockSpec(arr.shape, lambda i: (0, 0))

    flops = 2 * B_pad * (D_pad * HIDDEN + 2 * HIDDEN * HIDDEN
                         + HIDDEN * HIDDEN4_PAD + HIDDEN4_PAD * out_pad)
    transcendentals = B_pad * (3 * HIDDEN + HIDDEN4_PAD)
    bytes_accessed = (x_bf.size * 2
                      + sum(int(a.size) * a.dtype.itemsize for a in flat_params)
                      + B_pad * out_pad * 4)

    out = pl.pallas_call(
        mlp_kernel,
        out_shape=jax.ShapeDtypeStruct((B_pad, out_pad), jnp.float32),
        grid_spec=pltpu.PrefetchScalarGridSpec(
            num_scalar_prefetch=0,
            grid=(B_pad // tb,),
            in_specs=[pl.BlockSpec((tb, D_pad), lambda i: (i, 0))]
                     + [_resident(p) for p in flat_params],
            out_specs=pl.BlockSpec((tb, out_pad), lambda i: (i, 0)),
        ),
        compiler_params=pltpu.CompilerParams(
            dimension_semantics=("parallel",),
            vmem_limit_bytes=64 << 20),
        cost_estimate=pl.CostEstimate(
            flops=flops,
            transcendentals=transcendentals,
            bytes_accessed=bytes_accessed),
    )(x_bf, *flat_params)

    # Slice away batch / output padding.
    return out[:B, :out_dim]


def init_params(key, input_size, output_size):
    """Deterministic init mimicking PyTorch nn.Linear default (U[-1/sqrt(fan_in), +])."""
    dims = [(input_size, HIDDEN), (HIDDEN, HIDDEN), (HIDDEN, HIDDEN),
            (HIDDEN, HIDDEN4), (HIDDEN4, output_size)]
    params = []
    for (fan_in, fan_out) in dims:
        key, kw, kb = jax.random.split(key, 3)
        bound = 1.0 / math.sqrt(fan_in)
        w = jax.random.uniform(kw, (fan_in, fan_out), jnp.float32, -bound, bound)
        b = jax.random.uniform(kb, (1, fan_out), jnp.float32, -bound, bound)
        params.append((w, b))
    return params


def solver_reference_bf16(x, params):
    """Matched-precision JAX reference: bf16 matmul operands, f32 accumulation/GELU."""
    h = x.astype(jnp.bfloat16)
    for i, (w, b) in enumerate(params):
        h = jnp.dot(h, w.astype(jnp.bfloat16),
                    preferred_element_type=jnp.float32) + b
        if i < len(params) - 1:
            h = _gelu_exact(h).astype(jnp.bfloat16)
    return h


def solver_reference_f32(x, params):
    """Exact f32 reference matching the PyTorch module's math."""
    h = x
    for i, (w, b) in enumerate(params):
        h = h @ w + b
        if i < len(params) - 1:
            h = _gelu_exact(h)
    return h


if __name__ == "__main__":
    key = jax.random.PRNGKey(0)
    batch, input_size, output_size = 16, 32, 16

    kx, kp, kx2 = jax.random.split(key, 3)
    x = jax.random.normal(kx, (batch, input_size), jnp.float32)
    params = init_params(kp, input_size, output_size)
    prepared = prepare_params(params)     # one-time pad + bf16 cast

    out = solver_forward(x, prepared)
    out = jax.block_until_ready(out)
    assert out.shape == (batch, output_size)

    # Tight check against a matched-precision (bf16 operand / f32 accum) reference.
    ref_bf16 = solver_reference_bf16(x, params)
    assert jnp.allclose(out, ref_bf16, atol=1e-3, rtol=1e-3), \
        "mismatch vs matched-precision JAX reference"

    # Loose check against the exact-f32 PyTorch-equivalent reference
    # (bf16 MXU operands diverge slightly from the f32 torch forward).
    ref_f32 = solver_reference_f32(x, params)
    assert jnp.allclose(out, ref_f32, atol=1e-1, rtol=1e-1), \
        "mismatch vs exact f32 reference beyond bf16 tolerance"

    # Exercise the ragged-batch path (B not a multiple of the row alignment).
    x2 = jax.random.normal(kx2, (40, input_size), jnp.float32)
    out2 = jax.block_until_ready(solver_forward(x2, prepared))
    assert out2.shape == (40, output_size)
    assert jnp.allclose(out2, solver_reference_bf16(x2, params), atol=1e-3, rtol=1e-3), \
        "ragged-batch mismatch vs matched-precision reference"

    print("KERNEL_OK")
</pallas_src>

<mosaic_0001>
module attributes {stable_mosaic.version = 11 : i64} {
  func.func @mlp_kernel(%arg0: i32, %arg1: memref<16x128xbf16, #tpu.memory_space<vmem>>, %arg2: memref<128x128xbf16, #tpu.memory_space<vmem>>, %arg3: memref<1x128xf32, #tpu.memory_space<vmem>>, %arg4: memref<128x128xbf16, #tpu.memory_space<vmem>>, %arg5: memref<1x128xf32, #tpu.memory_space<vmem>>, %arg6: memref<128x128xbf16, #tpu.memory_space<vmem>>, %arg7: memref<1x128xf32, #tpu.memory_space<vmem>>, %arg8: memref<128x1024xbf16, #tpu.memory_space<vmem>>, %arg9: memref<1x1024xf32, #tpu.memory_space<vmem>>, %arg10: memref<1024x128xbf16, #tpu.memory_space<vmem>>, %arg11: memref<1x128xf32, #tpu.memory_space<vmem>>, %arg12: memref<16x128xf32, #tpu.memory_space<vmem>>) attributes {dimension_semantics = [#tpu.dimension_semantics<parallel>], iteration_bounds = array<i64: 1>, scalar_prefetch = 0 : i64, scratch_operands = 0 : i64, tpu.core_type = #tpu.core_type<tc>, window_params = [{transform_indices = @transform_0, window_bounds = array<i64: 16, 128>}, {pipeline_mode = #tpu.pipeline_mode<synchronous>, transform_indices = @transform_1, window_bounds = array<i64: 128, 128>}, {pipeline_mode = #tpu.pipeline_mode<synchronous>, transform_indices = @transform_2, window_bounds = array<i64: 1, 128>}, {pipeline_mode = #tpu.pipeline_mode<synchronous>, transform_indices = @transform_3, window_bounds = array<i64: 128, 128>}, {pipeline_mode = #tpu.pipeline_mode<synchronous>, transform_indices = @transform_4, window_bounds = array<i64: 1, 128>}, {pipeline_mode = #tpu.pipeline_mode<synchronous>, transform_indices = @transform_5, window_bounds = array<i64: 128, 128>}, {pipeline_mode = #tpu.pipeline_mode<synchronous>, transform_indices = @transform_6, window_bounds = array<i64: 1, 128>}, {pipeline_mode = #tpu.pipeline_mode<synchronous>, transform_indices = @transform_7, window_bounds = array<i64: 128, 1024>}, {pipeline_mode = #tpu.pipeline_mode<synchronous>, transform_indices = @transform_8, window_bounds = array<i64: 1, 1024>}, {pipeline_mode = #tpu.pipeline_mode<synchronous>, transform_indices = @transform_9, window_bounds = array<i64: 1024, 128>}, {pipeline_mode = #tpu.pipeline_mode<synchronous>, transform_indices = @transform_10, window_bounds = array<i64: 1, 128>}, {transform_indices = @transform_11, window_bounds = array<i64: 16, 128>}]} {
    %c0 = arith.constant 0 : index
    %c0_0 = arith.constant 0 : index
    %0 = vector.load %arg1[%c0, %c0_0] : memref<16x128xbf16, #tpu.memory_space<vmem>>, vector<16x128xbf16>
    %c0_1 = arith.constant 0 : index
    %c0_2 = arith.constant 0 : index
    %1 = vector.load %arg2[%c0_1, %c0_2] : memref<128x128xbf16, #tpu.memory_space<vmem>>, vector<128x128xbf16>
    %cst = arith.constant dense<0.000000e+00> : vector<16x128xf32>
    %2 = tpu.matmul %0, %1, %cst {dimension_numbers = #tpu.dot_dimension_numbers<[1], [0], [0], [1], [0, 0, 1, 1], [], []>} : vector<16x128xbf16>, vector<128x128xbf16>, vector<16x128xf32> -> vector<16x128xf32>
    %c0_3 = arith.constant 0 : index
    %c0_4 = arith.constant 0 : index
    %3 = vector.load %arg3[%c0_3, %c0_4] : memref<1x128xf32, #tpu.memory_space<vmem>>, vector<1x128xf32>
    %4 = vector.broadcast %3 : vector<1x128xf32> to vector<16x128xf32>
    %5 = arith.addf %2, %4 : vector<16x128xf32>
    %cst_5 = arith.constant 5.000000e-01 : f32
    %6 = vector.broadcast %cst_5 : f32 to vector<16x128xf32>
    %7 = arith.mulf %6, %5 : vector<16x128xf32>
    %cst_6 = arith.constant 0.707106769 : f32
    %8 = vector.broadcast %cst_6 : f32 to vector<16x128xf32>
    %9 = arith.mulf %5, %8 : vector<16x128xf32>
    %10 = math.erf %9 : vector<16x128xf32>
    %cst_7 = arith.constant 1.000000e+00 : f32
    %11 = vector.broadcast %cst_7 : f32 to vector<16x128xf32>
    %12 = arith.addf %11, %10 : vector<16x128xf32>
    %13 = arith.mulf %7, %12 : vector<16x128xf32>
    %14 = arith.truncf %13 : vector<16x128xf32> to vector<16x128xbf16>
    %c0_8 = arith.constant 0 : index
    %c0_9 = arith.constant 0 : index
    %15 = vector.load %arg4[%c0_8, %c0_9] : memref<128x128xbf16, #tpu.memory_space<vmem>>, vector<128x128xbf16>
    %cst_10 = arith.constant dense<0.000000e+00> : vector<16x128xf32>
    %16 = tpu.matmul %14, %15, %cst_10 {dimension_numbers = #tpu.dot_dimension_numbers<[1], [0], [0], [1], [0, 0, 1, 1], [], []>} : vector<16x128xbf16>, vector<128x128xbf16>, vector<16x128xf32> -> vector<16x128xf32>
    %c0_11 = arith.constant 0 : index
    %c0_12 = arith.constant 0 : index
    %17 = vector.load %arg5[%c0_11, %c0_12] : memref<1x128xf32, #tpu.memory_space<vmem>>, vector<1x128xf32>
    %18 = vector.broadcast %17 : vector<1x128xf32> to vector<16x128xf32>
    %19 = arith.addf %16, %18 : vector<16x128xf32>
    %cst_13 = arith.constant 5.000000e-01 : f32
    %20 = vector.broadcast %cst_13 : f32 to vector<16x128xf32>
    %21 = arith.mulf %20, %19 : vector<16x128xf32>
    %cst_14 = arith.constant 0.707106769 : f32
    %22 = vector.broadcast %cst_14 : f32 to vector<16x128xf32>
    %23 = arith.mulf %19, %22 : vector<16x128xf32>
    %24 = math.erf %23 : vector<16x128xf32>
    %cst_15 = arith.constant 1.000000e+00 : f32
    %25 = vector.broadcast %cst_15 : f32 to vector<16x128xf32>
    %26 = arith.addf %25, %24 : vector<16x128xf32>
    %27 = arith.mulf %21, %26 : vector<16x128xf32>
    %28 = arith.truncf %27 : vector<16x128xf32> to vector<16x128xbf16>
    %c0_16 = arith.constant 0 : index
    %c0_17 = arith.constant 0 : index
    %29 = vector.load %arg6[%c0_16, %c0_17] : memref<128x128xbf16, #tpu.memory_space<vmem>>, vector<128x128xbf16>
    %cst_18 = arith.constant dense<0.000000e+00> : vector<16x128xf32>
    %30 = tpu.matmul %28, %29, %cst_18 {dimension_numbers = #tpu.dot_dimension_numbers<[1], [0], [0], [1], [0, 0, 1, 1], [], []>} : vector<16x128xbf16>, vector<128x128xbf16>, vector<16x128xf32> -> vector<16x128xf32>
    %c0_19 = arith.constant 0 : index
    %c0_20 = arith.constant 0 : index
    %31 = vector.load %arg7[%c0_19, %c0_20] : memref<1x128xf32, #tpu.memory_space<vmem>>, vector<1x128xf32>
    %32 = vector.broadcast %31 : vector<1x128xf32> to vector<16x128xf32>
    %33 = arith.addf %30, %32 : vector<16x128xf32>
    %cst_21 = arith.constant 5.000000e-01 : f32
    %34 = vector.broadcast %cst_21 : f32 to vector<16x128xf32>
    %35 = arith.mulf %34, %33 : vector<16x128xf32>
    %cst_22 = arith.constant 0.707106769 : f32
    %36 = vector.broadcast %cst_22 : f32 to vector<16x128xf32>
    %37 = arith.mulf %33, %36 : vector<16x128xf32>
    %38 = math.erf %37 : vector<16x128xf32>
    %cst_23 = arith.constant 1.000000e+00 : f32
    %39 = vector.broadcast %cst_23 : f32 to vector<16x128xf32>
    %40 = arith.addf %39, %38 : vector<16x128xf32>
    %41 = arith.mulf %35, %40 : vector<16x128xf32>
    %42 = arith.truncf %41 : vector<16x128xf32> to vector<16x128xbf16>
    %c0_24 = arith.constant 0 : index
    %c0_25 = arith.constant 0 : index
    %43 = vector.load %arg8[%c0_24, %c0_25] : memref<128x1024xbf16, #tpu.memory_space<vmem>>, vector<128x1024xbf16>
    %cst_26 = arith.constant dense<0.000000e+00> : vector<16x1024xf32>
    %44 = tpu.matmul %42, %43, %cst_26 {dimension_numbers = #tpu.dot_dimension_numbers<[1], [0], [0], [1], [0, 0, 1, 1], [], []>} : vector<16x128xbf16>, vector<128x1024xbf16>, vector<16x1024xf32> -> vector<16x1024xf32>
    %c0_27 = arith.constant 0 : index
    %c0_28 = arith.constant 0 : index
    %45 = vector.load %arg9[%c0_27, %c0_28] : memref<1x1024xf32, #tpu.memory_space<vmem>>, vector<1x1024xf32>
    %46 = vector.broadcast %45 : vector<1x1024xf32> to vector<16x1024xf32>
    %47 = arith.addf %44, %46 : vector<16x1024xf32>
    %cst_29 = arith.constant 5.000000e-01 : f32
    %48 = vector.broadcast %cst_29 : f32 to vector<16x1024xf32>
    %49 = arith.mulf %48, %47 : vector<16x1024xf32>
    %cst_30 = arith.constant 0.707106769 : f32
    %50 = vector.broadcast %cst_30 : f32 to vector<16x1024xf32>
    %51 = arith.mulf %47, %50 : vector<16x1024xf32>
    %52 = math.erf %51 : vector<16x1024xf32>
    %cst_31 = arith.constant 1.000000e+00 : f32
    %53 = vector.broadcast %cst_31 : f32 to vector<16x1024xf32>
    %54 = arith.addf %53, %52 : vector<16x1024xf32>
    %55 = arith.mulf %49, %54 : vector<16x1024xf32>
    %56 = arith.truncf %55 : vector<16x1024xf32> to vector<16x1024xbf16>
    %c0_32 = arith.constant 0 : index
    %c0_33 = arith.constant 0 : index
    %57 = vector.load %arg10[%c0_32, %c0_33] : memref<1024x128xbf16, #tpu.memory_space<vmem>>, vector<1024x128xbf16>
    %cst_34 = arith.constant dense<0.000000e+00> : vector<16x128xf32>
    %58 = tpu.matmul %56, %57, %cst_34 {dimension_numbers = #tpu.dot_dimension_numbers<[1], [0], [0], [1], [0, 0, 1, 1], [], []>} : vector<16x1024xbf16>, vector<1024x128xbf16>, vector<16x128xf32> -> vector<16x128xf32>
    %c0_35 = arith.constant 0 : index
    %c0_36 = arith.constant 0 : index
    %59 = vector.load %arg11[%c0_35, %c0_36] : memref<1x128xf32, #tpu.memory_space<vmem>>, vector<1x128xf32>
    %60 = vector.broadcast %59 : vector<1x128xf32> to vector<16x128xf32>
    %61 = arith.addf %58, %60 : vector<16x128xf32>
    %c0_37 = arith.constant 0 : index
    %c0_38 = arith.constant 0 : index
    %62 = vector.load %arg12[%c0_37, %c0_38] : memref<16x128xf32, #tpu.memory_space<vmem>>, vector<16x128xf32>
    tpu.vector_store %arg12[%c0_37, %c0_38], %61 {strides = array<i32>} : memref<16x128xf32, #tpu.memory_space<vmem>>, vector<16x128xf32>,
    return
  }
  func.func @transform_0(%arg0: i32) -> (i32, i32) {
    %c0_i32 = arith.constant 0 : i32
    %c0_i32_0 = arith.constant 0 : i32
    return %arg0, %c0_i32 : i32, i32
  }
  func.func @transform_1(%arg0: i32) -> (i32, i32) {
    %c0_i32 = arith.constant 0 : i32
    %c0_i32_0 = arith.constant 0 : i32
    %c0_i32_1 = arith.constant 0 : i32
    return %c0_i32, %c0_i32_0 : i32, i32
  }
  func.func @transform_2(%arg0: i32) -> (i32, i32) {
    %c0_i32 = arith.constant 0 : i32
    %c0_i32_0 = arith.constant 0 : i32
    %c0_i32_1 = arith.constant 0 : i32
    return %c0_i32, %c0_i32_0 : i32, i32
  }
  func.func @transform_3(%arg0: i32) -> (i32, i32) {
    %c0_i32 = arith.constant 0 : i32
    %c0_i32_0 = arith.constant 0 : i32
    %c0_i32_1 = arith.constant 0 : i32
    return %c0_i32, %c0_i32_0 : i32, i32
  }
  func.func @transform_4(%arg0: i32) -> (i32, i32) {
    %c0_i32 = arith.constant 0 : i32
    %c0_i32_0 = arith.constant 0 : i32
    %c0_i32_1 = arith.constant 0 : i32
    return %c0_i32, %c0_i32_0 : i32, i32
  }
  func.func @transform_5(%arg0: i32) -> (i32, i32) {
    %c0_i32 = arith.constant 0 : i32
    %c0_i32_0 = arith.constant 0 : i32
    %c0_i32_1 = arith.constant 0 : i32
    return %c0_i32, %c0_i32_0 : i32, i32
  }
  func.func @transform_6(%arg0: i32) -> (i32, i32) {
    %c0_i32 = arith.constant 0 : i32
    %c0_i32_0 = arith.constant 0 : i32
    %c0_i32_1 = arith.constant 0 : i32
    return %c0_i32, %c0_i32_0 : i32, i32
  }
  func.func @transform_7(%arg0: i32) -> (i32, i32) {
    %c0_i32 = arith.constant 0 : i32
    %c0_i32_0 = arith.constant 0 : i32
    %c0_i32_1 = arith.constant 0 : i32
    return %c0_i32, %c0_i32_0 : i32, i32
  }
  func.func @transform_8(%arg0: i32) -> (i32, i32) {
    %c0_i32 = arith.constant 0 : i32
    %c0_i32_0 = arith.constant 0 : i32
    %c0_i32_1 = arith.constant 0 : i32
    return %c0_i32, %c0_i32_0 : i32, i32
  }
  func.func @transform_9(%arg0: i32) -> (i32, i32) {
    %c0_i32 = arith.constant 0 : i32
    %c0_i32_0 = arith.constant 0 : i32
    %c0_i32_1 = arith.constant 0 : i32
    return %c0_i32, %c0_i32_0 : i32, i32
  }
  func.func @transform_10(%arg0: i32) -> (i32, i32) {
    %c0_i32 = arith.constant 0 : i32
    %c0_i32_0 = arith.constant 0 : i32
    %c0_i32_1 = arith.constant 0 : i32
    return %c0_i32, %c0_i32_0 : i32, i32
  }
  func.func @transform_11(%arg0: i32) -> (i32, i32) {
    %c0_i32 = arith.constant 0 : i32
    %c0_i32_0 = arith.constant 0 : i32
    return %arg0, %c0_i32 : i32, i32
  }
}

</mosaic_0001>

<llo_original>
// kernel: tpu_custom_call.1
$region0: #{tpu_custom_call.1}
  #allocation0 [shape = 'u32[]', space=smem, size = 0x4, offset = 0x4, fixed_abs, tag = 'smem constant byte address 0x4 - core index']
  #allocation1 [shape = 'u32[144,128]{1,0:T(1,128)}', space=vmem, size = 0x12000, scoped, tag = 'internal scratch']
  %s0 = inlined_call_operand.hbm [shape: bf16[16,128], index: 0, kind: input, shape index: {}]
  %s1 = inlined_call_operand.hbm [shape: bf16[128,128], index: 1, kind: input, shape index: {}]
  %s2 = inlined_call_operand.vmem [shape: f32[1,128], index: 2, kind: input, shape index: {}]
  %s3 = inlined_call_operand.hbm [shape: bf16[128,128], index: 3, kind: input, shape index: {}]
  %s4 = inlined_call_operand.vmem [shape: f32[1,128], index: 4, kind: input, shape index: {}]
  %s5 = inlined_call_operand.hbm [shape: bf16[128,128], index: 5, kind: input, shape index: {}]
  %s6 = inlined_call_operand.vmem [shape: f32[1,128], index: 6, kind: input, shape index: {}]
  %s7 = inlined_call_operand.hbm [shape: bf16[128,1024], index: 7, kind: input, shape index: {}]
  %s8 = inlined_call_operand.vmem [shape: f32[1,1024], index: 8, kind: input, shape index: {}]
  %s9 = inlined_call_operand.hbm [shape: bf16[1024,128], index: 9, kind: input, shape index: {}]
  %s10 = inlined_call_operand.vmem [shape: f32[1,128], index: 10, kind: input, shape index: {}]
  %s11 = inlined_call_operand.hbm [shape: f32[16,128], index: 11, kind: output, shape index: {}]
  %s12 = sld [smem:[#allocation0]]
  $region78: #{tpu_custom_call.1} parent=0
    _
  %s14 = ssub.s32 1, %s12
  %s15 = scalar_select 0, %s14, %s12
  $region1: #{tpu_custom_call.1} parent=0
    #allocation2 [shape = 'u8[4096]{0}', space=vmem, size = 0x1000, scoped, tag = 'input window, operand 0, single buffered']
    #allocation3 [shape = 's32[1]{0}', space=sflag, size = 0x4, scoped, tag = 'scoped memory for tpu_custom_call.1']
    #allocation4 [shape = 's32[1]{0}', space=sflag, size = 0x4, scoped, tag = 'scoped memory for tpu_custom_call.1']
    #allocation5 [shape = 'u8[32768]{0}', space=vmem, size = 0x8000, scoped, tag = 'input window, operand 1, single buffered']
    #allocation6 [shape = 's32[1]{0}', space=sflag, size = 0x4, scoped, tag = 'scoped memory for tpu_custom_call.1']
    #allocation7 [shape = 'u8[32768]{0}', space=vmem, size = 0x8000, scoped, tag = 'input window, operand 3, single buffered']
    #allocation8 [shape = 'u8[32768]{0}', space=vmem, size = 0x8000, scoped, tag = 'input window, operand 5, single buffered']
    #allocation9 [shape = 's32[1]{0}', space=sflag, size = 0x4, scoped, tag = 'scoped memory for tpu_custom_call.1']
    #allocation10 [shape = 'u8[262144]{0}', space=vmem, size = 0x40000, scoped, tag = 'input window, operand 7, single buffered']
    #allocation11 [shape = 'u8[262144]{0}', space=vmem, size = 0x40000, scoped, tag = 'input window, operand 9, single buffered']
    #allocation12 [shape = 's32[1]{0}', space=sflag, size = 0x4, scoped, tag = 'scoped memory for tpu_custom_call.1']
    #allocation13 [shape = 'u8[8192]{0}', space=vmem, size = 0x2000, scoped, tag = 'output window, operand 0, single buffered']
    %16 = vsyncpa [#allocation3], 0
    %17 = vsyncpa [#allocation6], 0
    %18 = vsyncpa [#allocation9], 0
    %19 = vsyncpa [#allocation12], 0
    %20 = vsyncpa [#allocation4], 0
    // Predicated region
    $region2: #{tpu_custom_call.1} parent=1 // pred_check
      _
    $region3: #{tpu_custom_call.1} parent=1 // pred_check_branch
      %22 = sbr.rel (0) target = $region5
    $region4: #{tpu_custom_call.1} parent=1 // pred_region
      %s24 = ssub.s32 128, 128
      %25 = vsyncadd [#allocation3], %s24
      %s26 = sshll.u32 [#allocation2], 4
      %s27 = int_to_ptr.vmem [resolvable:$true] %s26
      %32 = dma.hbm_to_vmem [thread:$0]  %s0, 128, %s27, [#allocation3], 64, 64, 4
    $region5: #{tpu_custom_call.1} parent=1 // pred_fallthru
      _
    // Predicated region
    $region6: #{tpu_custom_call.1} parent=1 // pred_check
      _
    $region7: #{tpu_custom_call.1} parent=1 // pred_check_branch
      %34 = sbr.rel (0) target = $region9
    $region8: #{tpu_custom_call.1} parent=1 // pred_region
      %s36 = ssub.s32 1024, 1024
      %37 = vsyncadd [#allocation6], %s36
      %s38 = sshll.u32 [#allocation5], 4
      %s39 = int_to_ptr.vmem [resolvable:$true] %s38
      %44 = dma.hbm_to_vmem [thread:$0]  %s1, 1024, %s39, [#allocation6], 64, 64, 4
    $region9: #{tpu_custom_call.1} parent=1 // pred_fallthru
      _
    // Predicated region
    $region10: #{tpu_custom_call.1} parent=1 // pred_check
      _
    $region11: #{tpu_custom_call.1} parent=1 // pred_check_branch
      %46 = sbr.rel (0) target = $region13
    $region12: #{tpu_custom_call.1} parent=1 // pred_region
      _
    $region13: #{tpu_custom_call.1} parent=1 // pred_fallthru
      _
    // Predicated region
    $region14: #{tpu_custom_call.1} parent=1 // pred_check
      _
    $region15: #{tpu_custom_call.1} parent=1 // pred_check_branch
      %48 = sbr.rel (0) target = $region17
    $region16: #{tpu_custom_call.1} parent=1 // pred_region
      %s50 = ssub.s32 1024, 1024
      %51 = vsyncadd [#allocation6], %s50
      %s52 = sshll.u32 [#allocation7], 4
      %s53 = int_to_ptr.vmem [resolvable:$true] %s52
      %58 = dma.hbm_to_vmem [thread:$0]  %s3, 1024, %s53, [#allocation6], 64, 64, 4
    $region17: #{tpu_custom_call.1} parent=1 // pred_fallthru
      _
    // Predicated region
    $region18: #{tpu_custom_call.1} parent=1 // pred_check
      _
    $region19: #{tpu_custom_call.1} parent=1 // pred_check_branch
      %60 = sbr.rel (0) target = $region21
    $region20: #{tpu_custom_call.1} parent=1 // pred_region
      _
    $region21: #{tpu_custom_call.1} parent=1 // pred_fallthru
      _
    // Predicated region
    $region22: #{tpu_custom_call.1} parent=1 // pred_check
      _
    $region23: #{tpu_custom_call.1} parent=1 // pred_check_branch
      %62 = sbr.rel (0) target = $region25
    $region24: #{tpu_custom_call.1} parent=1 // pred_region
      %s64 = ssub.s32 1024, 1024
      %65 = vsyncadd [#allocation9], %s64
      %s66 = sshll.u32 [#allocation8], 4
      %s67 = int_to_ptr.vmem [resolvable:$true] %s66
      %72 = dma.hbm_to_vmem [thread:$0]  %s5, 1024, %s67, [#allocation9], 64, 64, 4
    $region25: #{tpu_custom_call.1} parent=1 // pred_fallthru
      _
    // Predicated region
    $region26: #{tpu_custom_call.1} parent=1 // pred_check
      _
    $region27: #{tpu_custom_call.1} parent=1 // pred_check_branch
      %74 = sbr.rel (0) target = $region29
    $region28: #{tpu_custom_call.1} parent=1 // pred_region
      _
    $region29: #{tpu_custom_call.1} parent=1 // pred_fallthru
      _
    // Predicated region
    $region30: #{tpu_custom_call.1} parent=1 // pred_check
      _
    $region31: #{tpu_custom_call.1} parent=1 // pred_check_branch
      %76 = sbr.rel (0) target = $region33
    $region32: #{tpu_custom_call.1} parent=1 // pred_region
      %s78 = ssub.s32 8192, 8192
      %79 = vsyncadd [#allocation9], %s78
      %s80 = sshll.u32 [#allocation10], 4
      %s81 = int_to_ptr.vmem [resolvable:$true] %s80
      %86 = dma.hbm_to_vmem [thread:$0]  %s7, 8192, %s81, [#allocation9], 512, 512, 32
    $region33: #{tpu_custom_call.1} parent=1 // pred_fallthru
      _
    // Predicated region
    $region34: #{tpu_custom_call.1} parent=1 // pred_check
      _
    $region35: #{tpu_custom_call.1} parent=1 // pred_check_branch
      %88 = sbr.rel (0) target = $region37
    $region36: #{tpu_custom_call.1} parent=1 // pred_region
      _
    $region37: #{tpu_custom_call.1} parent=1 // pred_fallthru
      _
    // Predicated region
    $region38: #{tpu_custom_call.1} parent=1 // pred_check
      _
    $region39: #{tpu_custom_call.1} parent=1 // pred_check_branch
      %90 = sbr.rel (0) target = $region41
    $region40: #{tpu_custom_call.1} parent=1 // pred_region
      %s92 = ssub.s32 8192, 8192
      %93 = vsyncadd [#allocation12], %s92
      %s94 = sshll.u32 [#allocation11], 4
      %s95 = int_to_ptr.vmem [resolvable:$true] %s94
      %100 = dma.hbm_to_vmem [thread:$0]  %s9, 8192, %s95, [#allocation12], 64, 64, 4
    $region41: #{tpu_custom_call.1} parent=1 // pred_fallthru
      _
    // Predicated region
    $region42: #{tpu_custom_call.1} parent=1 // pred_check
      _
    $region43: #{tpu_custom_call.1} parent=1 // pred_check_branch
      %102 = sbr.rel (0) target = $region45
    $region44: #{tpu_custom_call.1} parent=1 // pred_region
      _
    $region45: #{tpu_custom_call.1} parent=1 // pred_fallthru
      _
    // Predicated region
    $region46: #{tpu_custom_call.1} parent=1 // pred_check
      _
    $region47: #{tpu_custom_call.1} parent=1 // pred_check_branch
      %104 = sbr.rel (0) target = $region49
    $region48: #{tpu_custom_call.1} parent=1 // pred_region
      %105 = dma.done [#allocation3], 128
    $region49: #{tpu_custom_call.1} parent=1 // pred_fallthru
      _
    // Predicated region
    $region50: #{tpu_custom_call.1} parent=1 // pred_check
      _
    $region51: #{tpu_custom_call.1} parent=1 // pred_check_branch
      %107 = sbr.rel (0) target = $region53
    $region52: #{tpu_custom_call.1} parent=1 // pred_region
      %108 = dma.done [#allocation6], 1024
    $region53: #{tpu_custom_call.1} parent=1 // pred_fallthru
      _
    // Predicated region
    $region54: #{tpu_custom_call.1} parent=1 // pred_check
      _
    $region55: #{tpu_custom_call.1} parent=1 // pred_check_branch
      %110 = sbr.rel (0) target = $region57
    $region56: #{tpu_custom_call.1} parent=1 // pred_region
      %111 = dma.done [#allocation6], 1024
    $region57: #{tpu_custom_call.1} parent=1 // pred_fallthru
      _
    // Predicated region
    $region58: #{tpu_custom_call.1} parent=1 // pred_check
      _
    $region59: #{tpu_custom_call.1} parent=1 // pred_check_branch
      %113 = sbr.rel (0) target = $region61
    $region60: #{tpu_custom_call.1} parent=1 // pred_region
      %114 = dma.done [#allocation9], 1024
    $region61: #{tpu_custom_call.1} parent=1 // pred_fallthru
      _
    // Predicated region
    $region62: #{tpu_custom_call.1} parent=1 // pred_check
      _
    $region63: #{tpu_custom_call.1} parent=1 // pred_check_branch
      %116 = sbr.rel (0) target = $region65
    $region64: #{tpu_custom_call.1} parent=1 // pred_region
      %117 = dma.done [#allocation9], 8192
    $region65: #{tpu_custom_call.1} parent=1 // pred_fallthru
      _
    // Predicated region
    $region66: #{tpu_custom_call.1} parent=1 // pred_check
      _
    $region67: #{tpu_custom_call.1} parent=1 // pred_check_branch
      %119 = sbr.rel (0) target = $region69
    $region68: #{tpu_custom_call.1} parent=1 // pred_region
      %120 = dma.done [#allocation12], 8192
    $region69: #{tpu_custom_call.1} parent=1 // pred_fallthru
      _
    %v122 = vld [vmem:[#allocation2] sm:$0xf]
    %v123 = vld [vmem:[#allocation2 + $0x4] sm:$0xf]
    %v124 = vld [vmem:[#allocation5] sm:$0xf]
    %v125 = vld [vmem:[#allocation5 + $0x4] sm:$0xf]
    %v126 = vld [vmem:[#allocation5 + $0x8] sm:$0xf]
    %v127 = vld [vmem:[#allocation5 + $0xc] sm:$0xf]
    %v128 = vld [vmem:[#allocation5 + $0x10] sm:$0xf]
    %v129 = vld [vmem:[#allocation5 + $0x14] sm:$0xf]
    %v130 = vld [vmem:[#allocation5 + $0x18] sm:$0xf]
    %v131 = vld [vmem:[#allocation5 + $0x1c] sm:$0xf]
    %v132 = vld [vmem:[#allocation5 + $0x20] sm:$0xf]
    %v133 = vld [vmem:[#allocation5 + $0x24] sm:$0xf]
    %v134 = vld [vmem:[#allocation5 + $0x28] sm:$0xf]
    %v135 = vld [vmem:[#allocation5 + $0x2c] sm:$0xf]
    %v136 = vld [vmem:[#allocation5 + $0x30] sm:$0xf]
    %v137 = vld [vmem:[#allocation5 + $0x34] sm:$0xf]
    %v138 = vld [vmem:[#allocation5 + $0x38] sm:$0xf]
    %v139 = vld [vmem:[#allocation5 + $0x3c] sm:$0xf]
    %v140 = vld [vmem:[%s2] sm:$0x1]
    %v142 = vlaneseq
    %v143 = vshrl.u32 %v142, 7
    %v144 = vsub.s32 0, %v143
    %v145 = vrot.slane %v140, %v144
    %v149 = vunpack.c.l.b16 %v122
    %v150 = vunpack.c.l.b16 %v123
    %v151 = vpack.c.b16 %v150, %v149
    %v169 = vunpack.c.l.b16 %v124
    %v170 = vunpack.c.l.b16 %v125
    %v171 = vunpack.c.l.b16 %v126
    %v172 = vunpack.c.l.b16 %v127
    %v173 = vunpack.c.l.b16 %v128
    %v174 = vunpack.c.l.b16 %v129
    %v175 = vunpack.c.l.b16 %v130
    %v176 = vunpack.c.l.b16 %v131
    %v177 = vunpack.c.l.b16 %v132
    %v178 = vunpack.c.l.b16 %v133
    %v179 = vunpack.c.l.b16 %v134
    %v180 = vunpack.c.l.b16 %v135
    %v181 = vunpack.c.l.b16 %v136
    %v182 = vunpack.c.l.b16 %v137
    %v183 = vunpack.c.l.b16 %v138
    %v184 = vunpack.c.l.b16 %v139
    %v185 = vpack.c.b16 %v170, %v169
    %v186 = vpack.c.b16 %v172, %v171
    %v187 = vpack.c.b16 %v174, %v173
    %v188 = vpack.c.b16 %v176, %v175
    %v189 = vpack.c.b16 %v178, %v177
    %v190 = vpack.c.b16 %v180, %v179
    %v191 = vpack.c.b16 %v182, %v181
    %v192 = vpack.c.b16 %v184, %v183
    %201 = vmatprep.subr.bf16.mxu0 0
    %202 = vmatpush1.bf16.msra.mxu0 %v192
    %203 = vmatprep.subr.bf16.mxu0 0
    %204 = vmatpush1.bf16.msra.mxu0 %v191
    %205 = vmatprep.subr.bf16.mxu0 0
    %206 = vmatpush1.bf16.msra.mxu0 %v190
    %207 = vmatprep.subr.bf16.mxu0 0
    %208 = vmatpush1.bf16.msra.mxu0 %v189
    %209 = vmatprep.subr.bf16.mxu0 0
    %210 = vmatpush1.bf16.msra.mxu0 %v188
    %211 = vmatprep.subr.bf16.mxu0 0
    %212 = vmatpush1.bf16.msra.mxu0 %v187
    %213 = vmatprep.subr.bf16.mxu0 0
    %214 = vmatpush1.bf16.msra.mxu0 %v186
    %215 = vmatprep.subr.bf16.mxu0 0
    %216 = vmatpush1.bf16.msra.mxu0 %v185
    %217 = vmatprep.subr.bf16.mxu0 0
    %218 = vmatpush2.bf16.msra.mxu0 0
    %219 = vmatprep.subr.bf16.mxu0 0
    %220 = vmatpush2.bf16.msra.mxu0 0
    %221 = vmatprep.subr.bf16.mxu0 0
    %222 = vmatpush2.bf16.msra.mxu0 0
    %223 = vmatprep.subr.bf16.mxu0 0
    %224 = vmatpush2.bf16.msra.mxu0 0
    %225 = vmatprep.subr.bf16.mxu0 0
    %226 = vmatpush2.bf16.msra.mxu0 0
    %227 = vmatprep.subr.bf16.mxu0 0
    %228 = vmatpush2.bf16.msra.mxu0 0
    %229 = vmatprep.subr.bf16.mxu0 0
    %230 = vmatpush2.bf16.msra.mxu0 0
    %231 = vmatprep.subr.bf16.mxu0 0
    %232 = vmatpush2.bf16.msra.mxu0 0
    %233 = vmatprep.mubr.bf16.mxu0 0
    %234 = vmatmul.mubr.bf16.gmra.mxu0 %v151
    %v235 = vpop.f32.mrf.mxu0
    %v236 = vadd.f32 %v145, %v235
    %v237 = vpop.f32.mrf.mxu0
    %v238 = vpop.f32.mrf.mxu0
    %v239 = vadd.f32 %v145, %v238
    %v240 = vpop.f32.mrf.mxu0
    %241 = vdwg.mxu0
    %v242 = vmul.f32 %v236, 0.5
    %v243 = vmul.f32 %v239, 0.5
    %v244 = vmul.f32 %v236, 0.70710677
    %v245 = vmul.f32 %v239, 0.70710677
    %v246 = verf.f32.pop %v244
    %v247 = verf.f32.pop %v245
    %v248 = vadd.f32 %v246, 1.0
    %v249 = vadd.f32 %v247, 1.0
    %v250 = vmul.f32 %v242, %v248
    %v251 = vmul.f32 %v243, %v249
    %v252 = vpack.c.bf16 %v251, %v250
    %v253 = vld [vmem:[#allocation7] sm:$0xf]
    %v254 = vld [vmem:[#allocation7 + $0x4] sm:$0xf]
    %v255 = vld [vmem:[#allocation7 + $0x8] sm:$0xf]
    %v256 = vld [vmem:[#allocation7 + $0xc] sm:$0xf]
    %v257 = vld [vmem:[#allocation7 + $0x10] sm:$0xf]
    %v258 = vld [vmem:[#allocation7 + $0x14] sm:$0xf]
    %v259 = vld [vmem:[#allocation7 + $0x18] sm:$0xf]
    %v260 = vld [vmem:[#allocation7 + $0x1c] sm:$0xf]
    %v261 = vld [vmem:[#allocation7 + $0x20] sm:$0xf]
    %v262 = vld [vmem:[#allocation7 + $0x24] sm:$0xf]
    %v263 = vld [vmem:[#allocation7 + $0x28] sm:$0xf]
    %v264 = vld [vmem:[#allocation7 + $0x2c] sm:$0xf]
    %v265 = vld [vmem:[#allocation7 + $0x30] sm:$0xf]
    %v266 = vld [vmem:[#allocation7 + $0x34] sm:$0xf]
    %v267 = vld [vmem:[#allocation7 + $0x38] sm:$0xf]
    %v268 = vld [vmem:[#allocation7 + $0x3c] sm:$0xf]
    %v269 = vld [vmem:[%s4] sm:$0x1]
    %v271 = vlaneseq
    %v272 = vshrl.u32 %v271, 7
    %v273 = vsub.s32 0, %v272
    %v274 = vrot.slane %v269, %v273
    %v292 = vunpack.c.l.b16 %v253
    %v293 = vunpack.c.l.b16 %v254
    %v294 = vunpack.c.l.b16 %v255
    %v295 = vunpack.c.l.b16 %v256
    %v296 = vunpack.c.l.b16 %v257
    %v297 = vunpack.c.l.b16 %v258
    %v298 = vunpack.c.l.b16 %v259
    %v299 = vunpack.c.l.b16 %v260
    %v300 = vunpack.c.l.b16 %v261
    %v301 = vunpack.c.l.b16 %v262
    %v302 = vunpack.c.l.b16 %v263
    %v303 = vunpack.c.l.b16 %v264
    %v304 = vunpack.c.l.b16 %v265
    %v305 = vunpack.c.l.b16 %v266
    %v306 = vunpack.c.l.b16 %v267
    %v307 = vunpack.c.l.b16 %v268
    %v308 = vpack.c.b16 %v293, %v292
    %v309 = vpack.c.b16 %v295, %v294
    %v310 = vpack.c.b16 %v297, %v296
    %v311 = vpack.c.b16 %v299, %v298
    %v312 = vpack.c.b16 %v301, %v300
    %v313 = vpack.c.b16 %v303, %v302
    %v314 = vpack.c.b16 %v305, %v304
    %v315 = vpack.c.b16 %v307, %v306
    %324 = vmatprep.subr.bf16.mxu0 0
    %325 = vmatpush1.bf16.msra.mxu0 %v315
    %326 = vmatprep.subr.bf16.mxu0 0
    %327 = vmatpush1.bf16.msra.mxu0 %v314
    %328 = vmatprep.subr.bf16.mxu0 0
    %329 = vmatpush1.bf16.msra.mxu0 %v313
    %330 = vmatprep.subr.bf16.mxu0 0
    %331 = vmatpush1.bf16.msra.mxu0 %v312
    %332 = vmatprep.subr.bf16.mxu0 0
    %333 = vmatpush1.bf16.msra.mxu0 %v311
    %334 = vmatprep.subr.bf16.mxu0 0
    %335 = vmatpush1.bf16.msra.mxu0 %v310
    %336 = vmatprep.subr.bf16.mxu0 0
    %337 = vmatpush1.bf16.msra.mxu0 %v309
    %338 = vmatprep.subr.bf16.mxu0 0
    %339 = vmatpush1.bf16.msra.mxu0 %v308
    %340 = vmatprep.subr.bf16.mxu0 0
    %341 = vmatpush2.bf16.msra.mxu0 0
    %342 = vmatprep.subr.bf16.mxu0 0
    %343 = vmatpush2.bf16.msra.mxu0 0
    %344 = vmatprep.subr.bf16.mxu0 0
    %345 = vmatpush2.bf16.msra.mxu0 0
    %346 = vmatprep.subr.bf16.mxu0 0
    %347 = vmatpush2.bf16.msra.mxu0 0
    %348 = vmatprep.subr.bf16.mxu0 0
    %349 = vmatpush2.bf16.msra.mxu0 0
    %350 = vmatprep.subr.bf16.mxu0 0
    %351 = vmatpush2.bf16.msra.mxu0 0
    %352 = vmatprep.subr.bf16.mxu0 0
    %353 = vmatpush2.bf16.msra.mxu0 0
    %354 = vmatprep.subr.bf16.mxu0 0
    %355 = vmatpush2.bf16.msra.mxu0 0
    %356 = vmatprep.mubr.bf16.mxu0 0
    %357 = vmatmul.mubr.bf16.gmra.mxu0 %v252
    %v358 = vpop.f32.mrf.mxu0
    %v359 = vadd.f32 %v274, %v358
    %v360 = vpop.f32.mrf.mxu0
    %v361 = vpop.f32.mrf.mxu0
    %v362 = vadd.f32 %v274, %v361
    %v363 = vpop.f32.mrf.mxu0
    %364 = vdwg.mxu0
    %v365 = vmul.f32 %v359, 0.5
    %v366 = vmul.f32 %v362, 0.5
    %v367 = vmul.f32 %v359, 0.70710677
    %v368 = vmul.f32 %v362, 0.70710677
    %v369 = verf.f32.pop %v367
    %v370 = verf.f32.pop %v368
    %v371 = vadd.f32 %v369, 1.0
    %v372 = vadd.f32 %v370, 1.0
    %v373 = vmul.f32 %v365, %v371
    %v374 = vmul.f32 %v366, %v372
    %v375 = vpack.c.bf16 %v374, %v373
    %v376 = vld [vmem:[#allocation8] sm:$0xf]
    %v377 = vld [vmem:[#allocation8 + $0x4] sm:$0xf]
    %v378 = vld [vmem:[#allocation8 + $0x8] sm:$0xf]
    %v379 = vld [vmem:[#allocation8 + $0xc] sm:$0xf]
    %v380 = vld [vmem:[#allocation8 + $0x10] sm:$0xf]
    %v381 = vld [vmem:[#allocation8 + $0x14] sm:$0xf]
    %v382 = vld [vmem:[#allocation8 + $0x18] sm:$0xf]
    %v383 = vld [vmem:[#allocation8 + $0x1c] sm:$0xf]
    %v384 = vld [vmem:[#allocation8 + $0x20] sm:$0xf]
    %v385 = vld [vmem:[#allocation8 + $0x24] sm:$0xf]
    %v386 = vld [vmem:[#allocation8 + $0x28] sm:$0xf]
    %v387 = vld [vmem:[#allocation8 + $0x2c] sm:$0xf]
    %v388 = vld [vmem:[#allocation8 + $0x30] sm:$0xf]
    %v389 = vld [vmem:[#allocation8 + $0x34] sm:$0xf]
    %v390 = vld [vmem:[#allocation8 + $0x38] sm:$0xf]
    %v391 = vld [vmem:[#allocation8 + $0x3c] sm:$0xf]
    %v392 = vld [vmem:[%s6] sm:$0x1]
    %v394 = vlaneseq
    %v395 = vshrl.u32 %v394, 7
    %v396 = vsub.s32 0, %v395
    %v397 = vrot.slane %v392, %v396
    %v415 = vunpack.c.l.b16 %v376
    %v416 = vunpack.c.l.b16 %v377
    %v417 = vunpack.c.l.b16 %v378
    %v418 = vunpack.c.l.b16 %v379
    %v419 = vunpack.c.l.b16 %v380
    %v420 = vunpack.c.l.b16 %v381
    %v421 = vunpack.c.l.b16 %v382
    %v422 = vunpack.c.l.b16 %v383
    %v423 = vunpack.c.l.b16 %v384
    %v424 = vunpack.c.l.b16 %v385
    %v425 = vunpack.c.l.b16 %v386
    %v426 = vunpack.c.l.b16 %v387
    %v427 = vunpack.c.l.b16 %v388
    %v428 = vunpack.c.l.b16 %v389
    %v429 = vunpack.c.l.b16 %v390
    %v430 = vunpack.c.l.b16 %v391
    %v431 = vpack.c.b16 %v416, %v415
    %v432 = vpack.c.b16 %v418, %v417
    %v433 = vpack.c.b16 %v420, %v419
    %v434 = vpack.c.b16 %v422, %v421
    %v435 = vpack.c.b16 %v424, %v423
    %v436 = vpack.c.b16 %v426, %v425
    %v437 = vpack.c.b16 %v428, %v427
    %v438 = vpack.c.b16 %v430, %v429
    %447 = vmatprep.subr.bf16.mxu0 0
    %448 = vmatpush1.bf16.msra.mxu0 %v438
    %449 = vmatprep.subr.bf16.mxu0 0
    %450 = vmatpush1.bf16.msra.mxu0 %v437
    %451 = vmatprep.subr.bf16.mxu0 0
    %452 = vmatpush1.bf16.msra.mxu0 %v436
    %453 = vmatprep.subr.bf16.mxu0 0
    %454 = vmatpush1.bf16.msra.mxu0 %v435
    %455 = vmatprep.subr.bf16.mxu0 0
    %456 = vmatpush1.bf16.msra.mxu0 %v434
    %457 = vmatprep.subr.bf16.mxu0 0
    %458 = vmatpush1.bf16.msra.mxu0 %v433
    %459 = vmatprep.subr.bf16.mxu0 0
    %460 = vmatpush1.bf16.msra.mxu0 %v432
    %461 = vmatprep.subr.bf16.mxu0 0
    %462 = vmatpush1.bf16.msra.mxu0 %v431
    %463 = vmatprep.subr.bf16.mxu0 0
    %464 = vmatpush2.bf16.msra.mxu0 0
    %465 = vmatprep.subr.bf16.mxu0 0
    %466 = vmatpush2.bf16.msra.mxu0 0
    %467 = vmatprep.subr.bf16.mxu0 0
    %468 = vmatpush2.bf16.msra.mxu0 0
    %469 = vmatprep.subr.bf16.mxu0 0
    %470 = vmatpush2.bf16.msra.mxu0 0
    %471 = vmatprep.subr.bf16.mxu0 0
    %472 = vmatpush2.bf16.msra.mxu0 0
    %473 = vmatprep.subr.bf16.mxu0 0
    %474 = vmatpush2.bf16.msra.mxu0 0
    %475 = vmatprep.subr.bf16.mxu0 0
    %476 = vmatpush2.bf16.msra.mxu0 0
    %477 = vmatprep.subr.bf16.mxu0 0
    %478 = vmatpush2.bf16.msra.mxu0 0
    %479 = vmatprep.mubr.bf16.mxu0 0
    %480 = vmatmul.mubr.bf16.gmra.mxu0 %v375
    %v481 = vpop.f32.mrf.mxu0
    %v482 = vadd.f32 %v397, %v481
    %v483 = vpop.f32.mrf.mxu0
    %v484 = vpop.f32.mrf.mxu0
    %v485 = vadd.f32 %v397, %v484
    %v486 = vpop.f32.mrf.mxu0
    %487 = vdwg.mxu0
    %v488 = vmul.f32 %v482, 0.5
    %v489 = vmul.f32 %v485, 0.5
    %v490 = vmul.f32 %v482, 0.70710677
    %v491 = vmul.f32 %v485, 0.70710677
    %v492 = verf.f32.pop %v490
    %v493 = verf.f32.pop %v491
    %v494 = vadd.f32 %v492, 1.0
    %v495 = vadd.f32 %v493, 1.0
    %v496 = vmul.f32 %v488, %v494
    %v497 = vmul.f32 %v489, %v495
    %v498 = vpack.c.bf16 %v497, %v496
    %v499 = vld [vmem:[#allocation10] sm:$0xff]
    %v500 = vld [vmem:[#allocation10 + $0x8] sm:$0xff]
    %v501 = vld [vmem:[#allocation10 + $0x10] sm:$0xff]
    %v502 = vld [vmem:[#allocation10 + $0x18] sm:$0xff]
    %v503 = vld [vmem:[#allocation10 + $0x20] sm:$0xff]
    %v504 = vld [vmem:[#allocation10 + $0x28] sm:$0xff]
    %v505 = vld [vmem:[#allocation10 + $0x30] sm:$0xff]
    %v506 = vld [vmem:[#allocation10 + $0x38] sm:$0xff]
    %v507 = vld [vmem:[#allocation10 + $0x40] sm:$0xff]
    %v508 = vld [vmem:[#allocation10 + $0x48] sm:$0xff]
    %v509 = vld [vmem:[#allocation10 + $0x50] sm:$0xff]
    %v510 = vld [vmem:[#allocation10 + $0x58] sm:$0xff]
    %v511 = vld [vmem:[#allocation10 + $0x60] sm:$0xff]
    %v512 = vld [vmem:[#allocation10 + $0x68] sm:$0xff]
    %v513 = vld [vmem:[#allocation10 + $0x70] sm:$0xff]
    %v514 = vld [vmem:[#allocation10 + $0x78] sm:$0xff]
    %v515 = vld [vmem:[#allocation10 + $0x80] sm:$0xff]
    %v516 = vld [vmem:[#allocation10 + $0x88] sm:$0xff]
    %v517 = vld [vmem:[#allocation10 + $0x90] sm:$0xff]
    %v518 = vld [vmem:[#allocation10 + $0x98] sm:$0xff]
    %v519 = vld [vmem:[#allocation10 + $0xa0] sm:$0xff]
    %v520 = vld [vmem:[#allocation10 + $0xa8] sm:$0xff]
    %v521 = vld [vmem:[#allocation10 + $0xb0] sm:$0xff]
    %v522 = vld [vmem:[#allocation10 + $0xb8] sm:$0xff]
    %v523 = vld [vmem:[#allocation10 + $0xc0] sm:$0xff]
    %v524 = vld [vmem:[#allocation10 + $0xc8] sm:$0xff]
    %v525 = vld [vmem:[#allocation10 + $0xd0] sm:$0xff]
    %v526 = vld [vmem:[#allocation10 + $0xd8] sm:$0xff]
    %v527 = vld [vmem:[#allocation10 + $0xe0] sm:$0xff]
    %v528 = vld [vmem:[#allocation10 + $0xe8] sm:$0xff]
    %v529 = vld [vmem:[#allocation10 + $0xf0] sm:$0xff]
    %v530 = vld [vmem:[#allocation10 + $0xf8] sm:$0xff]
    %v531 = vld [vmem:[#allocation10 + $0x100] sm:$0xff]
    %v532 = vld [vmem:[#allocation10 + $0x108] sm:$0xff]
    %v533 = vld [vmem:[#allocation10 + $0x110] sm:$0xff]
    %v534 = vld [vmem:[#allocation10 + $0x118] sm:$0xff]
    %v535 = vld [vmem:[#allocation10 + $0x120] sm:$0xff]
    %v536 = vld [vmem:[#allocation10 + $0x128] sm:$0xff]
    %v537 = vld [vmem:[#allocation10 + $0x130] sm:$0xff]
    %v538 = vld [vmem:[#allocation10 + $0x138] sm:$0xff]
    %v539 = vld [vmem:[#allocation10 + $0x140] sm:$0xff]
    %v540 = vld [vmem:[#allocation10 + $0x148] sm:$0xff]
    %v541 = vld [vmem:[#allocation10 + $0x150] sm:$0xff]
    %v542 = vld [vmem:[#allocation10 + $0x158] sm:$0xff]
    %v543 = vld [vmem:[#allocation10 + $0x160] sm:$0xff]
    %v544 = vld [vmem:[#allocation10 + $0x168] sm:$0xff]
    %v545 = vld [vmem:[#allocation10 + $0x170] sm:$0xff]
    %v546 = vld [vmem:[#allocation10 + $0x178] sm:$0xff]
    %v547 = vld [vmem:[#allocation10 + $0x180] sm:$0xff]
    %v548 = vld [vmem:[#allocation10 + $0x188] sm:$0xff]
    %v549 = vld [vmem:[#allocation10 + $0x190] sm:$0xff]
    %v550 = vld [vmem:[#allocation10 + $0x198] sm:$0xff]
    %v551 = vld [vmem:[#allocation10 + $0x1a0] sm:$0xff]
    %v552 = vld [vmem:[#allocation10 + $0x1a8] sm:$0xff]
    %v553 = vld [vmem:[#allocation10 + $0x1b0] sm:$0xff]
    %v554 = vld [vmem:[#allocation10 + $0x1b8] sm:$0xff]
    %v555 = vld [vmem:[#allocation10 + $0x1c0] sm:$0xff]
    %v556 = vld [vmem:[#allocation10 + $0x1c8] sm:$0xff]
    %v557 = vld [vmem:[#allocation10 + $0x1d0] sm:$0xff]
    %v558 = vld [vmem:[#allocation10 + $0x1d8] sm:$0xff]
    %v559 = vld [vmem:[#allocation10 + $0x1e0] sm:$0xff]
    %v560 = vld [vmem:[#allocation10 + $0x1e8] sm:$0xff]
    %v561 = vld [vmem:[#allocation10 + $0x1f0] sm:$0xff]
    %v562 = vld [vmem:[#allocation10 + $0x1f8] sm:$0xff]
    %v563 = vld [vmem:[%s8] sm:$0xff]
    %v565 = vlaneseq
    %v566 = vshrl.u32 %v565, 7
    %v567 = vsub.s32 0, %v566
    %v568 = vrot.slane %v563, %v567
    %v569 = vlaneseq
    %v570 = vshrl.u32 %v569, 7
    %v571 = vsub.s32 1, %v570
    %v572 = vrot.slane %v563, %v571
    %v573 = vlaneseq
    %v574 = vshrl.u32 %v573, 7
    %v575 = vsub.s32 2, %v574
    %v576 = vrot.slane %v563, %v575
    %v577 = vlaneseq
    %v578 = vshrl.u32 %v577, 7
    %v579 = vsub.s32 3, %v578
    %v580 = vrot.slane %v563, %v579
    %v581 = vlaneseq
    %v582 = vshrl.u32 %v581, 7
    %v583 = vsub.s32 4, %v582
    %v584 = vrot.slane %v563, %v583
    %v585 = vlaneseq
    %v586 = vshrl.u32 %v585, 7
    %v587 = vsub.s32 5, %v586
    %v588 = vrot.slane %v563, %v587
    %v589 = vlaneseq
    %v590 = vshrl.u32 %v589, 7
    %v591 = vsub.s32 6, %v590
    %v592 = vrot.slane %v563, %v591
    %v593 = vlaneseq
    %v594 = vshrl.u32 %v593, 7
    %v595 = vsub.s32 7, %v594
    %v596 = vrot.slane %v563, %v595
    %v669 = vunpack.c.l.b16 %v499
    %v670 = vunpack.c.h.b16 %v499
    %v671 = vunpack.c.l.b16 %v500
    %v672 = vunpack.c.h.b16 %v500
    %v673 = vunpack.c.l.b16 %v501
    %v674 = vunpack.c.h.b16 %v501
    %v675 = vunpack.c.l.b16 %v502
    %v676 = vunpack.c.h.b16 %v502
    %v677 = vunpack.c.l.b16 %v503
    %v678 = vunpack.c.h.b16 %v503
    %v679 = vunpack.c.l.b16 %v504
    %v680 = vunpack.c.h.b16 %v504
    %v681 = vunpack.c.l.b16 %v505
    %v682 = vunpack.c.h.b16 %v505
    %v683 = vunpack.c.l.b16 %v506
    %v684 = vunpack.c.h.b16 %v506
    %v685 = vunpack.c.l.b16 %v507
    %v686 = vunpack.c.h.b16 %v507
    %v687 = vunpack.c.l.b16 %v508
    %v688 = vunpack.c.h.b16 %v508
    %v689 = vunpack.c.l.b16 %v509
    %v690 = vunpack.c.h.b16 %v509
    %v691 = vunpack.c.l.b16 %v510
    %v692 = vunpack.c.h.b16 %v510
    %v693 = vunpack.c.l.b16 %v511
    %v694 = vunpack.c.h.b16 %v511
    %v695 = vunpack.c.l.b16 %v512
    %v696 = vunpack.c.h.b16 %v512
    %v697 = vunpack.c.l.b16 %v513
    %v698 = vunpack.c.h.b16 %v513
    %v699 = vunpack.c.l.b16 %v514
    %v700 = vunpack.c.h.b16 %v514
    %v701 = vunpack.c.l.b16 %v515
    %v702 = vunpack.c.h.b16 %v515
    %v703 = vunpack.c.l.b16 %v516
    %v704 = vunpack.c.h.b16 %v516
    %v705 = vunpack.c.l.b16 %v517
    %v706 = vunpack.c.h.b16 %v517
    %v707 = vunpack.c.l.b16 %v518
    %v708 = vunpack.c.h.b16 %v518
    %v709 = vunpack.c.l.b16 %v519
    %v710 = vunpack.c.h.b16 %v519
    %v711 = vunpack.c.l.b16 %v520
    %v712 = vunpack.c.h.b16 %v520
    %v713 = vunpack.c.l.b16 %v521
    %v714 = vunpack.c.h.b16 %v521
    %v715 = vunpack.c.l.b16 %v522
    %v716 = vunpack.c.h.b16 %v522
    %v717 = vunpack.c.l.b16 %v523
    %v718 = vunpack.c.h.b16 %v523
    %v719 = vunpack.c.l.b16 %v524
    %v720 = vunpack.c.h.b16 %v524
    %v721 = vunpack.c.l.b16 %v525
    %v722 = vunpack.c.h.b16 %v525
    %v723 = vunpack.c.l.b16 %v526
    %v724 = vunpack.c.h.b16 %v526
    %v725 = vunpack.c.l.b16 %v527
    %v726 = vunpack.c.h.b16 %v527
    %v727 = vunpack.c.l.b16 %v528
    %v728 = vunpack.c.h.b16 %v528
    %v729 = vunpack.c.l.b16 %v529
    %v730 = vunpack.c.h.b16 %v529
    %v731 = vunpack.c.l.b16 %v530
    %v732 = vunpack.c.h.b16 %v530
    %v733 = vunpack.c.l.b16 %v531
    %v734 = vunpack.c.h.b16 %v531
    %v735 = vunpack.c.l.b16 %v532
    %v736 = vunpack.c.h.b16 %v532
    %v737 = vunpack.c.l.b16 %v533
    %v738 = vunpack.c.h.b16 %v533
    %v739 = vunpack.c.l.b16 %v534
    %v740 = vunpack.c.h.b16 %v534
    %v741 = vunpack.c.l.b16 %v535
    %v742 = vunpack.c.h.b16 %v535
    %v743 = vunpack.c.l.b16 %v536
    %v744 = vunpack.c.h.b16 %v536
    %v745 = vunpack.c.l.b16 %v537
    %v746 = vunpack.c.h.b16 %v537
    %v747 = vunpack.c.l.b16 %v538
    %v748 = vunpack.c.h.b16 %v538
    %v749 = vunpack.c.l.b16 %v539
    %v750 = vunpack.c.h.b16 %v539
    %v751 = vunpack.c.l.b16 %v540
    %v752 = vunpack.c.h.b16 %v540
    %v753 = vunpack.c.l.b16 %v541
    %v754 = vunpack.c.h.b16 %v541
    %v755 = vunpack.c.l.b16 %v542
    %v756 = vunpack.c.h.b16 %v542
    %v757 = vunpack.c.l.b16 %v543
    %v758 = vunpack.c.h.b16 %v543
    %v759 = vunpack.c.l.b16 %v544
    %v760 = vunpack.c.h.b16 %v544
    %v761 = vunpack.c.l.b16 %v545
    %v762 = vunpack.c.h.b16 %v545
    %v763 = vunpack.c.l.b16 %v546
    %v764 = vunpack.c.h.b16 %v546
    %v765 = vunpack.c.l.b16 %v547
    %v766 = vunpack.c.h.b16 %v547
    %v767 = vunpack.c.l.b16 %v548
    %v768 = vunpack.c.h.b16 %v548
    %v769 = vunpack.c.l.b16 %v549
    %v770 = vunpack.c.h.b16 %v549
    %v771 = vunpack.c.l.b16 %v550
    %v772 = vunpack.c.h.b16 %v550
    %v773 = vunpack.c.l.b16 %v551
    %v774 = vunpack.c.h.b16 %v551
    %v775 = vunpack.c.l.b16 %v552
    %v776 = vunpack.c.h.b16 %v552
    %v777 = vunpack.c.l.b16 %v553
    %v778 = vunpack.c.h.b16 %v553
    %v779 = vunpack.c.l.b16 %v554
    %v780 = vunpack.c.h.b16 %v554
    %v781 = vunpack.c.l.b16 %v555
    %v782 = vunpack.c.h.b16 %v555
    %v783 = vunpack.c.l.b16 %v556
    %v784 = vunpack.c.h.b16 %v556
    %v785 = vunpack.c.l.b16 %v557
    %v786 = vunpack.c.h.b16 %v557
    %v787 = vunpack.c.l.b16 %v558
    %v788 = vunpack.c.h.b16 %v558
    %v789 = vunpack.c.l.b16 %v559
    %v790 = vunpack.c.h.b16 %v559
    %v791 = vunpack.c.l.b16 %v560
    %v792 = vunpack.c.h.b16 %v560
    %v793 = vunpack.c.l.b16 %v561
    %v794 = vunpack.c.h.b16 %v561
    %v795 = vunpack.c.l.b16 %v562
    %v796 = vunpack.c.h.b16 %v562
    %v797 = vpack.c.b16 %v677, %v669
    %v798 = vpack.c.b16 %v678, %v670
    %v799 = vpack.c.b16 %v679, %v671
    %v800 = vpack.c.b16 %v680, %v672
    %v801 = vpack.c.b16 %v681, %v673
    %v802 = vpack.c.b16 %v682, %v674
    %v803 = vpack.c.b16 %v683, %v675
    %v804 = vpack.c.b16 %v684, %v676
    %v805 = vpack.c.b16 %v693, %v685
    %v806 = vpack.c.b16 %v694, %v686
    %v807 = vpack.c.b16 %v695, %v687
    %v808 = vpack.c.b16 %v696, %v688
    %v809 = vpack.c.b16 %v697, %v689
    %v810 = vpack.c.b16 %v698, %v690
    %v811 = vpack.c.b16 %v699, %v691
    %v812 = vpack.c.b16 %v700, %v692
    %v813 = vpack.c.b16 %v709, %v701
    %v814 = vpack.c.b16 %v710, %v702
    %v815 = vpack.c.b16 %v711, %v703
    %v816 = vpack.c.b16 %v712, %v704
    %v817 = vpack.c.b16 %v713, %v705
    %v818 = vpack.c.b16 %v714, %v706
    %v819 = vpack.c.b16 %v715, %v707
    %v820 = vpack.c.b16 %v716, %v708
    %v821 = vpack.c.b16 %v725, %v717
    %v822 = vpack.c.b16 %v726, %v718
    %v823 = vpack.c.b16 %v727, %v719
    %v824 = vpack.c.b16 %v728, %v720
    %v825 = vpack.c.b16 %v729, %v721
    %v826 = vpack.c.b16 %v730, %v722
    %v827 = vpack.c.b16 %v731, %v723
    %v828 = vpack.c.b16 %v732, %v724
    %v829 = vpack.c.b16 %v741, %v733
    %v830 = vpack.c.b16 %v742, %v734
    %v831 = vpack.c.b16 %v743, %v735
    %v832 = vpack.c.b16 %v744, %v736
    %v833 = vpack.c.b16 %v745, %v737
    %v834 = vpack.c.b16 %v746, %v738
    %v835 = vpack.c.b16 %v747, %v739
    %v836 = vpack.c.b16 %v748, %v740
    %v837 = vpack.c.b16 %v757, %v749
    %v838 = vpack.c.b16 %v758, %v750
    %v839 = vpack.c.b16 %v759, %v751
    %v840 = vpack.c.b16 %v760, %v752
    %v841 = vpack.c.b16 %v761, %v753
    %v842 = vpack.c.b16 %v762, %v754
    %v843 = vpack.c.b16 %v763, %v755
    %v844 = vpack.c.b16 %v764, %v756
    %v845 = vpack.c.b16 %v773, %v765
    %v846 = vpack.c.b16 %v774, %v766
    %v847 = vpack.c.b16 %v775, %v767
    %v848 = vpack.c.b16 %v776, %v768
    %v849 = vpack.c.b16 %v777, %v769
    %v850 = vpack.c.b16 %v778, %v770
    %v851 = vpack.c.b16 %v779, %v771
    %v852 = vpack.c.b16 %v780, %v772
    %v853 = vpack.c.b16 %v789, %v781
    %v854 = vpack.c.b16 %v790, %v782
    %v855 = vpack.c.b16 %v791, %v783
    %v856 = vpack.c.b16 %v792, %v784
    %v857 = vpack.c.b16 %v793, %v785
    %v858 = vpack.c.b16 %v794, %v786
    %v859 = vpack.c.b16 %v795, %v787
    %v860 = vpack.c.b16 %v796, %v788
    %925 = vmatprep.subr.bf16.mxu0 %v854
    %926 = vmatpush1.bf16.msra.mxu0 %v853
    %927 = vmatprep.subr.bf16.mxu0 %v846
    %928 = vmatpush1.bf16.msra.mxu0 %v845
    %929 = vmatprep.subr.bf16.mxu0 %v838
    %930 = vmatpush1.bf16.msra.mxu0 %v837
    %931 = vmatprep.subr.bf16.mxu0 %v830
    %932 = vmatpush1.bf16.msra.mxu0 %v829
    %933 = vmatprep.subr.bf16.mxu0 %v822
    %934 = vmatpush1.bf16.msra.mxu0 %v821
    %935 = vmatprep.subr.bf16.mxu0 %v814
    %936 = vmatpush1.bf16.msra.mxu0 %v813
    %937 = vmatprep.subr.bf16.mxu0 %v806
    %938 = vmatpush1.bf16.msra.mxu0 %v805
    %939 = vmatprep.subr.bf16.mxu0 %v798
    %940 = vmatpush1.bf16.msra.mxu0 %v797
    %941 = vmatprep.subr.bf16.mxu0 0
    %942 = vmatpush2.bf16.msra.mxu0 0
    %943 = vmatprep.subr.bf16.mxu0 0
    %944 = vmatpush2.bf16.msra.mxu0 0
    %945 = vmatprep.subr.bf16.mxu0 0
    %946 = vmatpush2.bf16.msra.mxu0 0
    %947 = vmatprep.subr.bf16.mxu0 0
    %948 = vmatpush2.bf16.msra.mxu0 0
    %949 = vmatprep.subr.bf16.mxu0 0
    %950 = vmatpush2.bf16.msra.mxu0 0
    %951 = vmatprep.subr.bf16.mxu0 0
    %952 = vmatpush2.bf16.msra.mxu0 0
    %953 = vmatprep.subr.bf16.mxu0 0
    %954 = vmatpush2.bf16.msra.mxu0 0
    %955 = vmatprep.subr.bf16.mxu0 0
    %956 = vmatpush2.bf16.msra.mxu0 0
    %957 = vmatprep.mubr.bf16.mxu0 0
    %958 = vmatmul.mubr.bf16.gmra.mxu0 %v498
    %v959 = vpop.f32.mrf.mxu0
    %v960 = vadd.f32 %v568, %v959
    %v961 = vpop.f32.mrf.mxu0
    %v962 = vadd.f32 %v572, %v961
    %v963 = vpop.f32.mrf.mxu0
    %v964 = vadd.f32 %v568, %v963
    %v965 = vpop.f32.mrf.mxu0
    %v966 = vadd.f32 %v572, %v965
    %967 = vdwg.mxu0
    %968 = vmatprep.subr.bf16.mxu0 %v856
    %969 = vmatpush1.bf16.msra.mxu0 %v855
    %970 = vmatprep.subr.bf16.mxu0 %v848
    %971 = vmatpush1.bf16.msra.mxu0 %v847
    %972 = vmatprep.subr.bf16.mxu0 %v840
    %973 = vmatpush1.bf16.msra.mxu0 %v839
    %974 = vmatprep.subr.bf16.mxu0 %v832
    %975 = vmatpush1.bf16.msra.mxu0 %v831
    %976 = vmatprep.subr.bf16.mxu0 %v824
    %977 = vmatpush1.bf16.msra.mxu0 %v823
    %978 = vmatprep.subr.bf16.mxu0 %v816
    %979 = vmatpush1.bf16.msra.mxu0 %v815
    %980 = vmatprep.subr.bf16.mxu0 %v808
    %981 = vmatpush1.bf16.msra.mxu0 %v807
    %982 = vmatprep.subr.bf16.mxu0 %v800
    %983 = vmatpush1.bf16.msra.mxu0 %v799
    %984 = vmatprep.subr.bf16.mxu0 0
    %985 = vmatpush2.bf16.msra.mxu0 0
    %986 = vmatprep.subr.bf16.mxu0 0
    %987 = vmatpush2.bf16.msra.mxu0 0
    %988 = vmatprep.subr.bf16.mxu0 0
    %989 = vmatpush2.bf16.msra.mxu0 0
    %990 = vmatprep.subr.bf16.mxu0 0
    %991 = vmatpush2.bf16.msra.mxu0 0
    %992 = vmatprep.subr.bf16.mxu0 0
    %993 = vmatpush2.bf16.msra.mxu0 0
    %994 = vmatprep.subr.bf16.mxu0 0
    %995 = vmatpush2.bf16.msra.mxu0 0
    %996 = vmatprep.subr.bf16.mxu0 0
    %997 = vmatpush2.bf16.msra.mxu0 0
    %998 = vmatprep.subr.bf16.mxu0 0
    %999 = vmatpush2.bf16.msra.mxu0 0
    %1000 = vmatprep.mubr.bf16.mxu0 0
    %1001 = vmatmul.mubr.bf16.gmra.mxu0 %v498
    %v1002 = vpop.f32.mrf.mxu0
    %v1003 = vadd.f32 %v576, %v1002
    %v1004 = vpop.f32.mrf.mxu0
    %v1005 = vadd.f32 %v580, %v1004
    %v1006 = vpop.f32.mrf.mxu0
    %v1007 = vadd.f32 %v576, %v1006
    %v1008 = vpop.f32.mrf.mxu0
    %v1009 = vadd.f32 %v580, %v1008
    %1010 = vdwg.mxu0
    %1011 = vmatprep.subr.bf16.mxu0 %v858
    %1012 = vmatpush1.bf16.msra.mxu0 %v857
    %1013 = vmatprep.subr.bf16.mxu0 %v850
    %1014 = vmatpush1.bf16.msra.mxu0 %v849
    %1015 = vmatprep.subr.bf16.mxu0 %v842
    %1016 = vmatpush1.bf16.msra.mxu0 %v841
    %1017 = vmatprep.subr.bf16.mxu0 %v834
    %1018 = vmatpush1.bf16.msra.mxu0 %v833
    %1019 = vmatprep.subr.bf16.mxu0 %v826
    %1020 = vmatpush1.bf16.msra.mxu0 %v825
    %1021 = vmatprep.subr.bf16.mxu0 %v818
    %1022 = vmatpush1.bf16.msra.mxu0 %v817
    %1023 = vmatprep.subr.bf16.mxu0 %v810
    %1024 = vmatpush1.bf16.msra.mxu0 %v809
    %1025 = vmatprep.subr.bf16.mxu0 %v802
    %1026 = vmatpush1.bf16.msra.mxu0 %v801
    %1027 = vmatprep.subr.bf16.mxu0 0
    %1028 = vmatpush2.bf16.msra.mxu0 0
    %1029 = vmatprep.subr.bf16.mxu0 0
    %1030 = vmatpush2.bf16.msra.mxu0 0
    %1031 = vmatprep.subr.bf16.mxu0 0
    %1032 = vmatpush2.bf16.msra.mxu0 0
    %1033 = vmatprep.subr.bf16.mxu0 0
    %1034 = vmatpush2.bf16.msra.mxu0 0
    %1035 = vmatprep.subr.bf16.mxu0 0
    %1036 = vmatpush2.bf16.msra.mxu0 0
    %1037 = vmatprep.subr.bf16.mxu0 0
    %1038 = vmatpush2.bf16.msra.mxu0 0
    %1039 = vmatprep.subr.bf16.mxu0 0
    %1040 = vmatpush2.bf16.msra.mxu0 0
    %1041 = vmatprep.subr.bf16.mxu0 0
    %1042 = vmatpush2.bf16.msra.mxu0 0
    %1043 = vmatprep.mubr.bf16.mxu0 0
    %1044 = vmatmul.mubr.bf16.gmra.mxu0 %v498
    %v1045 = vpop.f32.mrf.mxu0
    %v1046 = vadd.f32 %v584, %v1045
    %v1047 = vpop.f32.mrf.mxu0
    %v1048 = vadd.f32 %v588, %v1047
    %v1049 = vpop.f32.mrf.mxu0
    %v1050 = vadd.f32 %v584, %v1049
    %v1051 = vpop.f32.mrf.mxu0
    %v1052 = vadd.f32 %v588, %v1051
    %1053 = vdwg.mxu0
    %1054 = vmatprep.subr.bf16.mxu0 %v860
    %1055 = vmatpush1.bf16.msra.mxu0 %v859
    %1056 = vmatprep.subr.bf16.mxu0 %v852
    %1057 = vmatpush1.bf16.msra.mxu0 %v851
    %1058 = vmatprep.subr.bf16.mxu0 %v844
    %1059 = vmatpush1.bf16.msra.mxu0 %v843
    %1060 = vmatprep.subr.bf16.mxu0 %v836
    %1061 = vmatpush1.bf16.msra.mxu0 %v835
    %1062 = vmatprep.subr.bf16.mxu0 %v828
    %1063 = vmatpush1.bf16.msra.mxu0 %v827
    %1064 = vmatprep.subr.bf16.mxu0 %v820
    %1065 = vmatpush1.bf16.msra.mxu0 %v819
    %1066 = vmatprep.subr.bf16.mxu0 %v812
    %1067 = vmatpush1.bf16.msra.mxu0 %v811
    %1068 = vmatprep.subr.bf16.mxu0 %v804
    %1069 = vmatpush1.bf16.msra.mxu0 %v803
    %1070 = vmatprep.subr.bf16.mxu0 0
    %1071 = vmatpush2.bf16.msra.mxu0 0
    %1072 = vmatprep.subr.bf16.mxu0 0
    %1073 = vmatpush2.bf16.msra.mxu0 0
    %1074 = vmatprep.subr.bf16.mxu0 0
    %1075 = vmatpush2.bf16.msra.mxu0 0
    %1076 = vmatprep.subr.bf16.mxu0 0
    %1077 = vmatpush2.bf16.msra.mxu0 0
    %1078 = vmatprep.subr.bf16.mxu0 0
    %1079 = vmatpush2.bf16.msra.mxu0 0
    %1080 = vmatprep.subr.bf16.mxu0 0
    %1081 = vmatpush2.bf16.msra.mxu0 0
    %1082 = vmatprep.subr.bf16.mxu0 0
    %1083 = vmatpush2.bf16.msra.mxu0 0
    %1084 = vmatprep.subr.bf16.mxu0 0
    %1085 = vmatpush2.bf16.msra.mxu0 0
    %1086 = vmatprep.mubr.bf16.mxu0 0
    %1087 = vmatmul.mubr.bf16.gmra.mxu0 %v498
    %v1088 = vpop.f32.mrf.mxu0
    %v1089 = vadd.f32 %v592, %v1088
    %v1090 = vpop.f32.mrf.mxu0
    %v1091 = vadd.f32 %v596, %v1090
    %v1092 = vpop.f32.mrf.mxu0
    %v1093 = vadd.f32 %v592, %v1092
    %v1094 = vpop.f32.mrf.mxu0
    %v1095 = vadd.f32 %v596, %v1094
    %1096 = vdwg.mxu0
    %v1097 = vmul.f32 %v960, 0.5
    %v1098 = vmul.f32 %v962, 0.5
    %v1099 = vmul.f32 %v1003, 0.5
    %v1100 = vmul.f32 %v1005, 0.5
    %v1101 = vmul.f32 %v1046, 0.5
    %v1102 = vmul.f32 %v1048, 0.5
    %v1103 = vmul.f32 %v1089, 0.5
    %v1104 = vmul.f32 %v1091, 0.5
    %v1105 = vmul.f32 %v964, 0.5
    %v1106 = vmul.f32 %v966, 0.5
    %v1107 = vmul.f32 %v1007, 0.5
    %v1108 = vmul.f32 %v1009, 0.5
    %v1109 = vmul.f32 %v1050, 0.5
    %v1110 = vmul.f32 %v1052, 0.5
    %v1111 = vmul.f32 %v1093, 0.5
    %v1112 = vmul.f32 %v1095, 0.5
    %v1113 = vmul.f32 %v960, 0.70710677
    %v1114 = vmul.f32 %v962, 0.70710677
    %v1115 = vmul.f32 %v1003, 0.70710677
    %v1116 = vmul.f32 %v1005, 0.70710677
    %v1117 = vmul.f32 %v1046, 0.70710677
    %v1118 = vmul.f32 %v1048, 0.70710677
    %v1119 = vmul.f32 %v1089, 0.70710677
    %v1120 = vmul.f32 %v1091, 0.70710677
    %v1121 = vmul.f32 %v964, 0.70710677
    %v1122 = vmul.f32 %v966, 0.70710677
    %v1123 = vmul.f32 %v1007, 0.70710677
    %v1124 = vmul.f32 %v1009, 0.70710677
    %v1125 = vmul.f32 %v1050, 0.70710677
    %v1126 = vmul.f32 %v1052, 0.70710677
    %v1127 = vmul.f32 %v1093, 0.70710677
    %v1128 = vmul.f32 %v1095, 0.70710677
    %v1129 = verf.f32.pop %v1113
    %v1130 = verf.f32.pop %v1114
    %v1131 = verf.f32.pop %v1115
    %v1132 = verf.f32.pop %v1116
    %v1133 = verf.f32.pop %v1117
    %v1134 = verf.f32.pop %v1118
    %v1135 = verf.f32.pop %v1119
    %v1136 = verf.f32.pop %v1120
    %v1137 = verf.f32.pop %v1121
    %v1138 = verf.f32.pop %v1122
    %v1139 = verf.f32.pop %v1123
    %v1140 = verf.f32.pop %v1124
    %v1141 = verf.f32.pop %v1125
    %v1142 = verf.f32.pop %v1126
    %v1143 = verf.f32.pop %v1127
    %v1144 = verf.f32.pop %v1128
    %v1145 = vadd.f32 %v1129, 1.0
    %v1146 = vadd.f32 %v1130, 1.0
    %v1147 = vadd.f32 %v1131, 1.0
    %v1148 = vadd.f32 %v1132, 1.0
    %v1149 = vadd.f32 %v1133, 1.0
    %v1150 = vadd.f32 %v1134, 1.0
    %v1151 = vadd.f32 %v1135, 1.0
    %v1152 = vadd.f32 %v1136, 1.0
    %v1153 = vadd.f32 %v1137, 1.0
    %v1154 = vadd.f32 %v1138, 1.0
    %v1155 = vadd.f32 %v1139, 1.0
    %v1156 = vadd.f32 %v1140, 1.0
    %v1157 = vadd.f32 %v1141, 1.0
    %v1158 = vadd.f32 %v1142, 1.0
    %v1159 = vadd.f32 %v1143, 1.0
    %v1160 = vadd.f32 %v1144, 1.0
    %v1161 = vmul.f32 %v1097, %v1145
    %v1162 = vmul.f32 %v1098, %v1146
    %v1163 = vmul.f32 %v1099, %v1147
    %v1164 = vmul.f32 %v1100, %v1148
    %v1165 = vmul.f32 %v1101, %v1149
    %v1166 = vmul.f32 %v1102, %v1150
    %v1167 = vmul.f32 %v1103, %v1151
    %v1168 = vmul.f32 %v1104, %v1152
    %v1169 = vmul.f32 %v1105, %v1153
    %v1170 = vmul.f32 %v1106, %v1154
    %v1171 = vmul.f32 %v1107, %v1155
    %v1172 = vmul.f32 %v1108, %v1156
    %v1173 = vmul.f32 %v1109, %v1157
    %v1174 = vmul.f32 %v1110, %v1158
    %v1175 = vmul.f32 %v1111, %v1159
    %v1176 = vmul.f32 %v1112, %v1160
    %v1177 = vpack.c.bf16 %v1169, %v1161
    %v1178 = vpack.c.bf16 %v1170, %v1162
    %v1179 = vpack.c.bf16 %v1171, %v1163
    %v1180 = vpack.c.bf16 %v1172, %v1164
    %v1181 = vpack.c.bf16 %v1173, %v1165
    %v1182 = vpack.c.bf16 %v1174, %v1166
    %v1183 = vpack.c.bf16 %v1175, %v1167
    %v1184 = vpack.c.bf16 %v1176, %v1168
    %v1185 = vld [vmem:[#allocation11] sm:$0xf]
    %v1186 = vld [vmem:[#allocation11 + $0x4] sm:$0xf]
    %v1187 = vld [vmem:[#allocation11 + $0x8] sm:$0xf]
    %v1188 = vld [vmem:[#allocation11 + $0xc] sm:$0xf]
    %v1189 = vld [vmem:[#allocation11 + $0x10] sm:$0xf]
    %v1190 = vld [vmem:[#allocation11 + $0x14] sm:$0xf]
    %v1191 = vld [vmem:[#allocation11 + $0x18] sm:$0xf]
    %v1192 = vld [vmem:[#allocation11 + $0x1c] sm:$0xf]
    %v1193 = vld [vmem:[#allocation11 + $0x20] sm:$0xf]
    %v1194 = vld [vmem:[#allocation11 + $0x24] sm:$0xf]
    %v1195 = vld [vmem:[#allocation11 + $0x28] sm:$0xf]
    %v1196 = vld [vmem:[#allocation11 + $0x2c] sm:$0xf]
    %v1197 = vld [vmem:[#allocation11 + $0x30] sm:$0xf]
    %v1198 = vld [vmem:[#allocation11 + $0x34] sm:$0xf]
    %v1199 = vld [vmem:[#allocation11 + $0x38] sm:$0xf]
    %v1200 = vld [vmem:[#allocation11 + $0x3c] sm:$0xf]
    %v1201 = vld [vmem:[#allocation11 + $0x40] sm:$0xf]
    %v1202 = vld [vmem:[#allocation11 + $0x44] sm:$0xf]
    %v1203 = vld [vmem:[#allocation11 + $0x48] sm:$0xf]
    %v1204 = vld [vmem:[#allocation11 + $0x4c] sm:$0xf]
    %v1205 = vld [vmem:[#allocation11 + $0x50] sm:$0xf]
    %v1206 = vld [vmem:[#allocation11 + $0x54] sm:$0xf]
    %v1207 = vld [vmem:[#allocation11 + $0x58] sm:$0xf]
    %v1208 = vld [vmem:[#allocation11 + $0x5c] sm:$0xf]
    %v1209 = vld [vmem:[#allocation11 + $0x60] sm:$0xf]
    %v1210 = vld [vmem:[#allocation11 + $0x64] sm:$0xf]
    %v1211 = vld [vmem:[#allocation11 + $0x68] sm:$0xf]
    %v1212 = vld [vmem:[#allocation11 + $0x6c] sm:$0xf]
    %v1213 = vld [vmem:[#allocation11 + $0x70] sm:$0xf]
    %v1214 = vld [vmem:[#allocation11 + $0x74] sm:$0xf]
    %v1215 = vld [vmem:[#allocation11 + $0x78] sm:$0xf]
    %v1216 = vld [vmem:[#allocation11 + $0x7c] sm:$0xf]
    %v1217 = vld [vmem:[#allocation11 + $0x80] sm:$0xf]
    %v1218 = vld [vmem:[#allocation11 + $0x84] sm:$0xf]
    %v1219 = vld [vmem:[#allocation11 + $0x88] sm:$0xf]
    %v1220 = vld [vmem:[#allocation11 + $0x8c] sm:$0xf]
    %v1221 = vld [vmem:[#allocation11 + $0x90] sm:$0xf]
    %v1222 = vld [vmem:[#allocation11 + $0x94] sm:$0xf]
    %v1223 = vld [vmem:[#allocation11 + $0x98] sm:$0xf]
    %v1224 = vld [vmem:[#allocation11 + $0x9c] sm:$0xf]
    %v1225 = vld [vmem:[#allocation11 + $0xa0] sm:$0xf]
    %v1226 = vld [vmem:[#allocation11 + $0xa4] sm:$0xf]
    %v1227 = vld [vmem:[#allocation11 + $0xa8] sm:$0xf]
    %v1228 = vld [vmem:[#allocation11 + $0xac] sm:$0xf]
    %v1229 = vld [vmem:[#allocation11 + $0xb0] sm:$0xf]
    %v1230 = vld [vmem:[#allocation11 + $0xb4] sm:$0xf]
    %v1231 = vld [vmem:[#allocation11 + $0xb8] sm:$0xf]
    %v1232 = vld [vmem:[#allocation11 + $0xbc] sm:$0xf]
    %v1233 = vld [vmem:[#allocation11 + $0xc0] sm:$0xf]
    %v1234 = vld [vmem:[#allocation11 + $0xc4] sm:$0xf]
    %v1235 = vld [vmem:[#allocation11 + $0xc8] sm:$0xf]
    %v1236 = vld [vmem:[#allocation11 + $0xcc] sm:$0xf]
    %v1237 = vld [vmem:[#allocation11 + $0xd0] sm:$0xf]
    %v1238 = vld [vmem:[#allocation11 + $0xd4] sm:$0xf]
    %v1239 = vld [vmem:[#allocation11 + $0xd8] sm:$0xf]
    %v1240 = vld [vmem:[#allocation11 + $0xdc] sm:$0xf]
    %v1241 = vld [vmem:[#allocation11 + $0xe0] sm:$0xf]
    %v1242 = vld [vmem:[#allocation11 + $0xe4] sm:$0xf]
    %v1243 = vld [vmem:[#allocation11 + $0xe8] sm:$0xf]
    %v1244 = vld [vmem:[#allocation11 + $0xec] sm:$0xf]
    %v1245 = vld [vmem:[#allocation11 + $0xf0] sm:$0xf]
    %v1246 = vld [vmem:[#allocation11 + $0xf4] sm:$0xf]
    %v1247 = vld [vmem:[#allocation11 + $0xf8] sm:$0xf]
    %v1248 = vld [vmem:[#allocation11 + $0xfc] sm:$0xf]
    %v1249 = vld [vmem:[#allocation11 + $0x100] sm:$0xf]
    %v1250 = vld [vmem:[#allocation11 + $0x104] sm:$0xf]
    %v1251 = vld [vmem:[#allocation11 + $0x108] sm:$0xf]
    %v1252 = vld [vmem:[#allocation11 + $0x10c] sm:$0xf]
    %v1253 = vld [vmem:[#allocation11 + $0x110] sm:$0xf]
    %v1254 = vld [vmem:[#allocation11 + $0x114] sm:$0xf]
    %v1255 = vld [vmem:[#allocation11 + $0x118] sm:$0xf]
    %v1256 = vld [vmem:[#allocation11 + $0x11c] sm:$0xf]
    %v1257 = vld [vmem:[#allocation11 + $0x120] sm:$0xf]
    %v1258 = vld [vmem:[#allocation11 + $0x124] sm:$0xf]
    %v1259 = vld [vmem:[#allocation11 + $0x128] sm:$0xf]
    %v1260 = vld [vmem:[#allocation11 + $0x12c] sm:$0xf]
    %v1261 = vld [vmem:[#allocation11 + $0x130] sm:$0xf]
    %v1262 = vld [vmem:[#allocation11 + $0x134] sm:$0xf]
    %v1263 = vld [vmem:[#allocation11 + $0x138] sm:$0xf]
    %v1264 = vld [vmem:[#allocation11 + $0x13c] sm:$0xf]
    %v1265 = vld [vmem:[#allocation11 + $0x140] sm:$0xf]
    %v1266 = vld [vmem:[#allocation11 + $0x144] sm:$0xf]
    %v1267 = vld [vmem:[#allocation11 + $0x148] sm:$0xf]
    %v1268 = vld [vmem:[#allocation11 + $0x14c] sm:$0xf]
    %v1269 = vld [vmem:[#allocation11 + $0x150] sm:$0xf]
    %v1270 = vld [vmem:[#allocation11 + $0x154] sm:$0xf]
    %v1271 = vld [vmem:[#allocation11 + $0x158] sm:$0xf]
    %v1272 = vld [vmem:[#allocation11 + $0x15c] sm:$0xf]
    %v1273 = vld [vmem:[#allocation11 + $0x160] sm:$0xf]
    %v1274 = vld [vmem:[#allocation11 + $0x164] sm:$0xf]
    %v1275 = vld [vmem:[#allocation11 + $0x168] sm:$0xf]
    %v1276 = vld [vmem:[#allocation11 + $0x16c] sm:$0xf]
    %v1277 = vld [vmem:[#allocation11 + $0x170] sm:$0xf]
    %v1278 = vld [vmem:[#allocation11 + $0x174] sm:$0xf]
    %v1279 = vld [vmem:[#allocation11 + $0x178] sm:$0xf]
    %v1280 = vld [vmem:[#allocation11 + $0x17c] sm:$0xf]
    %v1281 = vld [vmem:[#allocation11 + $0x180] sm:$0xf]
    %v1282 = vld [vmem:[#allocation11 + $0x184] sm:$0xf]
    %v1283 = vld [vmem:[#allocation11 + $0x188] sm:$0xf]
    %v1284 = vld [vmem:[#allocation11 + $0x18c] sm:$0xf]
    %v1285 = vld [vmem:[#allocation11 + $0x190] sm:$0xf]
    %v1286 = vld [vmem:[#allocation11 + $0x194] sm:$0xf]
    %v1287 = vld [vmem:[#allocation11 + $0x198] sm:$0xf]
    %v1288 = vld [vmem:[#allocation11 + $0x19c] sm:$0xf]
    %v1289 = vld [vmem:[#allocation11 + $0x1a0] sm:$0xf]
    %v1290 = vld [vmem:[#allocation11 + $0x1a4] sm:$0xf]
    %v1291 = vld [vmem:[#allocation11 + $0x1a8] sm:$0xf]
    %v1292 = vld [vmem:[#allocation11 + $0x1ac] sm:$0xf]
    %v1293 = vld [vmem:[#allocation11 + $0x1b0] sm:$0xf]
    %v1294 = vld [vmem:[#allocation11 + $0x1b4] sm:$0xf]
    %v1295 = vld [vmem:[#allocation11 + $0x1b8] sm:$0xf]
    %v1296 = vld [vmem:[#allocation11 + $0x1bc] sm:$0xf]
    %v1297 = vld [vmem:[#allocation11 + $0x1c0] sm:$0xf]
    %v1298 = vld [vmem:[#allocation11 + $0x1c4] sm:$0xf]
    %v1299 = vld [vmem:[#allocation11 + $0x1c8] sm:$0xf]
    %v1300 = vld [vmem:[#allocation11 + $0x1cc] sm:$0xf]
    %v1301 = vld [vmem:[#allocation11 + $0x1d0] sm:$0xf]
    %v1302 = vld [vmem:[#allocation11 + $0x1d4] sm:$0xf]
    %v1303 = vld [vmem:[#allocation11 + $0x1d8] sm:$0xf]
    %v1304 = vld [vmem:[#allocation11 + $0x1dc] sm:$0xf]
    %v1305 = vld [vmem:[#allocation11 + $0x1e0] sm:$0xf]
    %v1306 = vld [vmem:[#allocation11 + $0x1e4] sm:$0xf]
    %v1307 = vld [vmem:[#allocation11 + $0x1e8] sm:$0xf]
    %v1308 = vld [vmem:[#allocation11 + $0x1ec] sm:$0xf]
    %v1309 = vld [vmem:[#allocation11 + $0x1f0] sm:$0xf]
    %v1310 = vld [vmem:[#allocation11 + $0x1f4] sm:$0xf]
    %v1311 = vld [vmem:[#allocation11 + $0x1f8] sm:$0xf]
    %v1312 = vld [vmem:[#allocation11 + $0x1fc] sm:$0xf]
    %v1313 = vld [vmem:[%s10] sm:$0x1]
    %v1315 = vlaneseq
    %v1316 = vshrl.u32 %v1315, 7
    %v1317 = vsub.s32 0, %v1316
    %v1318 = vrot.slane %v1313, %v1317
    %v1448 = vunpack.c.l.b16 %v1185
    %v1449 = vunpack.c.l.b16 %v1186
    %v1450 = vunpack.c.l.b16 %v1187
    %v1451 = vunpack.c.l.b16 %v1188
    %v1452 = vunpack.c.l.b16 %v1189
    %v1453 = vunpack.c.l.b16 %v1190
    %v1454 = vunpack.c.l.b16 %v1191
    %v1455 = vunpack.c.l.b16 %v1192
    %v1456 = vunpack.c.l.b16 %v1193
    %v1457 = vunpack.c.l.b16 %v1194
    %v1458 = vunpack.c.l.b16 %v1195
    %v1459 = vunpack.c.l.b16 %v1196
    %v1460 = vunpack.c.l.b16 %v1197
    %v1461 = vunpack.c.l.b16 %v1198
    %v1462 = vunpack.c.l.b16 %v1199
    %v1463 = vunpack.c.l.b16 %v1200
    %v1464 = vunpack.c.l.b16 %v1201
    %v1465 = vunpack.c.l.b16 %v1202
    %v1466 = vunpack.c.l.b16 %v1203
    %v1467 = vunpack.c.l.b16 %v1204
    %v1468 = vunpack.c.l.b16 %v1205
    %v1469 = vunpack.c.l.b16 %v1206
    %v1470 = vunpack.c.l.b16 %v1207
    %v1471 = vunpack.c.l.b16 %v1208
    %v1472 = vunpack.c.l.b16 %v1209
    %v1473 = vunpack.c.l.b16 %v1210
    %v1474 = vunpack.c.l.b16 %v1211
    %v1475 = vunpack.c.l.b16 %v1212
    %v1476 = vunpack.c.l.b16 %v1213
    %v1477 = vunpack.c.l.b16 %v1214
    %v1478 = vunpack.c.l.b16 %v1215
    %v1479 = vunpack.c.l.b16 %v1216
    %v1480 = vunpack.c.l.b16 %v1217
    %v1481 = vunpack.c.l.b16 %v1218
    %v1482 = vunpack.c.l.b16 %v1219
    %v1483 = vunpack.c.l.b16 %v1220
    %v1484 = vunpack.c.l.b16 %v1221
    %v1485 = vunpack.c.l.b16 %v1222
    %v1486 = vunpack.c.l.b16 %v1223
    %v1487 = vunpack.c.l.b16 %v1224
    %v1488 = vunpack.c.l.b16 %v1225
    %v1489 = vunpack.c.l.b16 %v1226
    %v1490 = vunpack.c.l.b16 %v1227
    %v1491 = vunpack.c.l.b16 %v1228
    %v1492 = vunpack.c.l.b16 %v1229
    %v1493 = vunpack.c.l.b16 %v1230
    %v1494 = vunpack.c.l.b16 %v1231
    %v1495 = vunpack.c.l.b16 %v1232
    %v1496 = vunpack.c.l.b16 %v1233
    %v1497 = vunpack.c.l.b16 %v1234
    %v1498 = vunpack.c.l.b16 %v1235
    %v1499 = vunpack.c.l.b16 %v1236
    %v1500 = vunpack.c.l.b16 %v1237
    %v1501 = vunpack.c.l.b16 %v1238
    %v1502 = vunpack.c.l.b16 %v1239
    %v1503 = vunpack.c.l.b16 %v1240
    %v1504 = vunpack.c.l.b16 %v1241
    %v1505 = vunpack.c.l.b16 %v1242
    %v1506 = vunpack.c.l.b16 %v1243
    %v1507 = vunpack.c.l.b16 %v1244
    %v1508 = vunpack.c.l.b16 %v1245
    %v1509 = vunpack.c.l.b16 %v1246
    %v1510 = vunpack.c.l.b16 %v1247
    %v1511 = vunpack.c.l.b16 %v1248
    %v1512 = vunpack.c.l.b16 %v1249
    %v1513 = vunpack.c.l.b16 %v1250
    %v1514 = vunpack.c.l.b16 %v1251
    %v1515 = vunpack.c.l.b16 %v1252
    %v1516 = vunpack.c.l.b16 %v1253
    %v1517 = vunpack.c.l.b16 %v1254
    %v1518 = vunpack.c.l.b16 %v1255
    %v1519 = vunpack.c.l.b16 %v1256
    %v1520 = vunpack.c.l.b16 %v1257
    %v1521 = vunpack.c.l.b16 %v1258
    %v1522 = vunpack.c.l.b16 %v1259
    %v1523 = vunpack.c.l.b16 %v1260
    %v1524 = vunpack.c.l.b16 %v1261
    %v1525 = vunpack.c.l.b16 %v1262
    %v1526 = vunpack.c.l.b16 %v1263
    %v1527 = vunpack.c.l.b16 %v1264
    %v1528 = vunpack.c.l.b16 %v1265
    %v1529 = vunpack.c.l.b16 %v1266
    %v1530 = vunpack.c.l.b16 %v1267
    %v1531 = vunpack.c.l.b16 %v1268
    %v1532 = vunpack.c.l.b16 %v1269
    %v1533 = vunpack.c.l.b16 %v1270
    %v1534 = vunpack.c.l.b16 %v1271
    %v1535 = vunpack.c.l.b16 %v1272
    %v1536 = vunpack.c.l.b16 %v1273
    %v1537 = vunpack.c.l.b16 %v1274
    %v1538 = vunpack.c.l.b16 %v1275
    %v1539 = vunpack.c.l.b16 %v1276
    %v1540 = vunpack.c.l.b16 %v1277
    %v1541 = vunpack.c.l.b16 %v1278
    %v1542 = vunpack.c.l.b16 %v1279
    %v1543 = vunpack.c.l.b16 %v1280
    %v1544 = vunpack.c.l.b16 %v1281
    %v1545 = vunpack.c.l.b16 %v1282
    %v1546 = vunpack.c.l.b16 %v1283
    %v1547 = vunpack.c.l.b16 %v1284
    %v1548 = vunpack.c.l.b16 %v1285
    %v1549 = vunpack.c.l.b16 %v1286
    %v1550 = vunpack.c.l.b16 %v1287
    %v1551 = vunpack.c.l.b16 %v1288
    %v1552 = vunpack.c.l.b16 %v1289
    %v1553 = vunpack.c.l.b16 %v1290
    %v1554 = vunpack.c.l.b16 %v1291
    %v1555 = vunpack.c.l.b16 %v1292
    %v1556 = vunpack.c.l.b16 %v1293
    %v1557 = vunpack.c.l.b16 %v1294
    %v1558 = vunpack.c.l.b16 %v1295
    %v1559 = vunpack.c.l.b16 %v1296
    %v1560 = vunpack.c.l.b16 %v1297
    %v1561 = vunpack.c.l.b16 %v1298
    %v1562 = vunpack.c.l.b16 %v1299
    %v1563 = vunpack.c.l.b16 %v1300
    %v1564 = vunpack.c.l.b16 %v1301
    %v1565 = vunpack.c.l.b16 %v1302
    %v1566 = vunpack.c.l.b16 %v1303
    %v1567 = vunpack.c.l.b16 %v1304
    %v1568 = vunpack.c.l.b16 %v1305
    %v1569 = vunpack.c.l.b16 %v1306
    %v1570 = vunpack.c.l.b16 %v1307
    %v1571 = vunpack.c.l.b16 %v1308
    %v1572 = vunpack.c.l.b16 %v1309
    %v1573 = vunpack.c.l.b16 %v1310
    %v1574 = vunpack.c.l.b16 %v1311
    %v1575 = vunpack.c.l.b16 %v1312
    %v1576 = vpack.c.b16 %v1449, %v1448
    %v1577 = vpack.c.b16 %v1451, %v1450
    %v1578 = vpack.c.b16 %v1453, %v1452
    %v1579 = vpack.c.b16 %v1455, %v1454
    %v1580 = vpack.c.b16 %v1457, %v1456
    %v1581 = vpack.c.b16 %v1459, %v1458
    %v1582 = vpack.c.b16 %v1461, %v1460
    %v1583 = vpack.c.b16 %v1463, %v1462
    %v1584 = vpack.c.b16 %v1465, %v1464
    %v1585 = vpack.c.b16 %v1467, %v1466
    %v1586 = vpack.c.b16 %v1469, %v1468
    %v1587 = vpack.c.b16 %v1471, %v1470
    %v1588 = vpack.c.b16 %v1473, %v1472
    %v1589 = vpack.c.b16 %v1475, %v1474
    %v1590 = vpack.c.b16 %v1477, %v1476
    %v1591 = vpack.c.b16 %v1479, %v1478
    %v1592 = vpack.c.b16 %v1481, %v1480
    %v1593 = vpack.c.b16 %v1483, %v1482
    %v1594 = vpack.c.b16 %v1485, %v1484
    %v1595 = vpack.c.b16 %v1487, %v1486
    %v1596 = vpack.c.b16 %v1489, %v1488
    %v1597 = vpack.c.b16 %v1491, %v1490
    %v1598 = vpack.c.b16 %v1493, %v1492
    %v1599 = vpack.c.b16 %v1495, %v1494
    %v1600 = vpack.c.b16 %v1497, %v1496
    %v1601 = vpack.c.b16 %v1499, %v1498
    %v1602 = vpack.c.b16 %v1501, %v1500
    %v1603 = vpack.c.b16 %v1503, %v1502
    %v1604 = vpack.c.b16 %v1505, %v1504
    %v1605 = vpack.c.b16 %v1507, %v1506
    %v1606 = vpack.c.b16 %v1509, %v1508
    %v1607 = vpack.c.b16 %v1511, %v1510
    %v1608 = vpack.c.b16 %v1513, %v1512
    %v1609 = vpack.c.b16 %v1515, %v1514
    %v1610 = vpack.c.b16 %v1517, %v1516
    %v1611 = vpack.c.b16 %v1519, %v1518
    %v1612 = vpack.c.b16 %v1521, %v1520
    %v1613 = vpack.c.b16 %v1523, %v1522
    %v1614 = vpack.c.b16 %v1525, %v1524
    %v1615 = vpack.c.b16 %v1527, %v1526
    %v1616 = vpack.c.b16 %v1529, %v1528
    %v1617 = vpack.c.b16 %v1531, %v1530
    %v1618 = vpack.c.b16 %v1533, %v1532
    %v1619 = vpack.c.b16 %v1535, %v1534
    %v1620 = vpack.c.b16 %v1537, %v1536
    %v1621 = vpack.c.b16 %v1539, %v1538
    %v1622 = vpack.c.b16 %v1541, %v1540
    %v1623 = vpack.c.b16 %v1543, %v1542
    %v1624 = vpack.c.b16 %v1545, %v1544
    %v1625 = vpack.c.b16 %v1547, %v1546
    %v1626 = vpack.c.b16 %v1549, %v1548
    %v1627 = vpack.c.b16 %v1551, %v1550
    %v1628 = vpack.c.b16 %v1553, %v1552
    %v1629 = vpack.c.b16 %v1555, %v1554
    %v1630 = vpack.c.b16 %v1557, %v1556
    %v1631 = vpack.c.b16 %v1559, %v1558
    %v1632 = vpack.c.b16 %v1561, %v1560
    %v1633 = vpack.c.b16 %v1563, %v1562
    %v1634 = vpack.c.b16 %v1565, %v1564
    %v1635 = vpack.c.b16 %v1567, %v1566
    %v1636 = vpack.c.b16 %v1569, %v1568
    %v1637 = vpack.c.b16 %v1571, %v1570
    %v1638 = vpack.c.b16 %v1573, %v1572
    %v1639 = vpack.c.b16 %v1575, %v1574
    %1704 = vmatprep.subr.bf16.mxu0 0
    %1705 = vmatpush1.bf16.msra.mxu0 %v1583
    %1706 = vmatprep.subr.bf16.mxu0 0
    %1707 = vmatpush1.bf16.msra.mxu0 %v1582
    %1708 = vmatprep.subr.bf16.mxu0 0
    %1709 = vmatpush1.bf16.msra.mxu0 %v1581
    %1710 = vmatprep.subr.bf16.mxu0 0
    %1711 = vmatpush1.bf16.msra.mxu0 %v1580
    %1712 = vmatprep.subr.bf16.mxu0 0
    %1713 = vmatpush1.bf16.msra.mxu0 %v1579
    %1714 = vmatprep.subr.bf16.mxu0 0
    %1715 = vmatpush1.bf16.msra.mxu0 %v1578
    %1716 = vmatprep.subr.bf16.mxu0 0
    %1717 = vmatpush1.bf16.msra.mxu0 %v1577
    %1718 = vmatprep.subr.bf16.mxu0 0
    %1719 = vmatpush1.bf16.msra.mxu0 %v1576
    %1720 = vmatprep.subr.bf16.mxu0 0
    %1721 = vmatpush2.bf16.msra.mxu0 %v1591
    %1722 = vmatprep.subr.bf16.mxu0 0
    %1723 = vmatpush2.bf16.msra.mxu0 %v1590
    %1724 = vmatprep.subr.bf16.mxu0 0
    %1725 = vmatpush2.bf16.msra.mxu0 %v1589
    %1726 = vmatprep.subr.bf16.mxu0 0
    %1727 = vmatpush2.bf16.msra.mxu0 %v1588
    %1728 = vmatprep.subr.bf16.mxu0 0
    %1729 = vmatpush2.bf16.msra.mxu0 %v1587
    %1730 = vmatprep.subr.bf16.mxu0 0
    %1731 = vmatpush2.bf16.msra.mxu0 %v1586
    %1732 = vmatprep.subr.bf16.mxu0 0
    %1733 = vmatpush2.bf16.msra.mxu0 %v1585
    %1734 = vmatprep.subr.bf16.mxu0 0
    %1735 = vmatpush2.bf16.msra.mxu0 %v1584
    %1736 = vmatprep.mubr.bf16.mxu0 %v1178
    %1737 = vmatmul.mubr.bf16.gmra.mxu0 %v1177
    %v1738 = vpop.f32.mrf.mxu0
    %v1739 = vadd.f32 %v1318, %v1738
    %v1740 = vpop.f32.mrf.mxu0
    %v1741 = vpop.f32.mrf.mxu0
    %v1742 = vadd.f32 %v1318, %v1741
    %v1743 = vpop.f32.mrf.mxu0
    %1744 = vdwg.mxu0
    %1745 = vmatprep.subr.bf16.mxu0 0
    %1746 = vmatpush1.bf16.msra.mxu0 %v1599
    %1747 = vmatprep.subr.bf16.mxu0 0
    %1748 = vmatpush1.bf16.msra.mxu0 %v1598
    %1749 = vmatprep.subr.bf16.mxu0 0
    %1750 = vmatpush1.bf16.msra.mxu0 %v1597
    %1751 = vmatprep.subr.bf16.mxu0 0
    %1752 = vmatpush1.bf16.msra.mxu0 %v1596
    %1753 = vmatprep.subr.bf16.mxu0 0
    %1754 = vmatpush1.bf16.msra.mxu0 %v1595
    %1755 = vmatprep.subr.bf16.mxu0 0
    %1756 = vmatpush1.bf16.msra.mxu0 %v1594
    %1757 = vmatprep.subr.bf16.mxu0 0
    %1758 = vmatpush1.bf16.msra.mxu0 %v1593
    %1759 = vmatprep.subr.bf16.mxu0 0
    %1760 = vmatpush1.bf16.msra.mxu0 %v1592
    %1761 = vmatprep.subr.bf16.mxu0 0
    %1762 = vmatpush2.bf16.msra.mxu0 %v1607
    %1763 = vmatprep.subr.bf16.mxu0 0
    %1764 = vmatpush2.bf16.msra.mxu0 %v1606
    %1765 = vmatprep.subr.bf16.mxu0 0
    %1766 = vmatpush2.bf16.msra.mxu0 %v1605
    %1767 = vmatprep.subr.bf16.mxu0 0
    %1768 = vmatpush2.bf16.msra.mxu0 %v1604
    %1769 = vmatprep.subr.bf16.mxu0 0
    %1770 = vmatpush2.bf16.msra.mxu0 %v1603
    %1771 = vmatprep.subr.bf16.mxu0 0
    %1772 = vmatpush2.bf16.msra.mxu0 %v1602
    %1773 = vmatprep.subr.bf16.mxu0 0
    %1774 = vmatpush2.bf16.msra.mxu0 %v1601
    %1775 = vmatprep.subr.bf16.mxu0 0
    %1776 = vmatpush2.bf16.msra.mxu0 %v1600
    %1777 = vmatprep.mubr.bf16.mxu0 %v1180
    %1778 = vmatmul.mubr.bf16.gmra.mxu0 %v1179
    %v1779 = vpop.f32.mrf.mxu0
    %v1780 = vadd.f32 %v1739, %v1779
    %v1781 = vpop.f32.mrf.mxu0
    %v1782 = vpop.f32.mrf.mxu0
    %v1783 = vadd.f32 %v1742, %v1782
    %v1784 = vpop.f32.mrf.mxu0
    %1785 = vdwg.mxu0
    %1786 = vmatprep.subr.bf16.mxu0 0
    %1787 = vmatpush1.bf16.msra.mxu0 %v1615
    %1788 = vmatprep.subr.bf16.mxu0 0
    %1789 = vmatpush1.bf16.msra.mxu0 %v1614
    %1790 = vmatprep.subr.bf16.mxu0 0
    %1791 = vmatpush1.bf16.msra.mxu0 %v1613
    %1792 = vmatprep.subr.bf16.mxu0 0
    %1793 = vmatpush1.bf16.msra.mxu0 %v1612
    %1794 = vmatprep.subr.bf16.mxu0 0
    %1795 = vmatpush1.bf16.msra.mxu0 %v1611
    %1796 = vmatprep.subr.bf16.mxu0 0
    %1797 = vmatpush1.bf16.msra.mxu0 %v1610
    %1798 = vmatprep.subr.bf16.mxu0 0
    %1799 = vmatpush1.bf16.msra.mxu0 %v1609
    %1800 = vmatprep.subr.bf16.mxu0 0
    %1801 = vmatpush1.bf16.msra.mxu0 %v1608
    %1802 = vmatprep.subr.bf16.mxu0 0
    %1803 = vmatpush2.bf16.msra.mxu0 %v1623
    %1804 = vmatprep.subr.bf16.mxu0 0
    %1805 = vmatpush2.bf16.msra.mxu0 %v1622
    %1806 = vmatprep.subr.bf16.mxu0 0
    %1807 = vmatpush2.bf16.msra.mxu0 %v1621
    %1808 = vmatprep.subr.bf16.mxu0 0
    %1809 = vmatpush2.bf16.msra.mxu0 %v1620
    %1810 = vmatprep.subr.bf16.mxu0 0
    %1811 = vmatpush2.bf16.msra.mxu0 %v1619
    %1812 = vmatprep.subr.bf16.mxu0 0
    %1813 = vmatpush2.bf16.msra.mxu0 %v1618
    %1814 = vmatprep.subr.bf16.mxu0 0
    %1815 = vmatpush2.bf16.msra.mxu0 %v1617
    %1816 = vmatprep.subr.bf16.mxu0 0
    %1817 = vmatpush2.bf16.msra.mxu0 %v1616
    %1818 = vmatprep.mubr.bf16.mxu0 %v1182
    %1819 = vmatmul.mubr.bf16.gmra.mxu0 %v1181
    %v1820 = vpop.f32.mrf.mxu0
    %v1821 = vadd.f32 %v1780, %v1820
    %v1822 = vpop.f32.mrf.mxu0
    %v1823 = vpop.f32.mrf.mxu0
    %v1824 = vadd.f32 %v1783, %v1823
    %v1825 = vpop.f32.mrf.mxu0
    %1826 = vdwg.mxu0
    %1827 = vmatprep.subr.bf16.mxu0 0
    %1828 = vmatpush1.bf16.msra.mxu0 %v1631
    %1829 = vmatprep.subr.bf16.mxu0 0
    %1830 = vmatpush1.bf16.msra.mxu0 %v1630
    %1831 = vmatprep.subr.bf16.mxu0 0
    %1832 = vmatpush1.bf16.msra.mxu0 %v1629
    %1833 = vmatprep.subr.bf16.mxu0 0
    %1834 = vmatpush1.bf16.msra.mxu0 %v1628
    %1835 = vmatprep.subr.bf16.mxu0 0
    %1836 = vmatpush1.bf16.msra.mxu0 %v1627
    %1837 = vmatprep.subr.bf16.mxu0 0
    %1838 = vmatpush1.bf16.msra.mxu0 %v1626
    %1839 = vmatprep.subr.bf16.mxu0 0
    %1840 = vmatpush1.bf16.msra.mxu0 %v1625
    %1841 = vmatprep.subr.bf16.mxu0 0
    %1842 = vmatpush1.bf16.msra.mxu0 %v1624
    %1843 = vmatprep.subr.bf16.mxu0 0
    %1844 = vmatpush2.bf16.msra.mxu0 %v1639
    %1845 = vmatprep.subr.bf16.mxu0 0
    %1846 = vmatpush2.bf16.msra.mxu0 %v1638
    %1847 = vmatprep.subr.bf16.mxu0 0
    %1848 = vmatpush2.bf16.msra.mxu0 %v1637
    %1849 = vmatprep.subr.bf16.mxu0 0
    %1850 = vmatpush2.bf16.msra.mxu0 %v1636
    %1851 = vmatprep.subr.bf16.mxu0 0
    %1852 = vmatpush2.bf16.msra.mxu0 %v1635
    %1853 = vmatprep.subr.bf16.mxu0 0
    %1854 = vmatpush2.bf16.msra.mxu0 %v1634
    %1855 = vmatprep.subr.bf16.mxu0 0
    %1856 = vmatpush2.bf16.msra.mxu0 %v1633
    %1857 = vmatprep.subr.bf16.mxu0 0
    %1858 = vmatpush2.bf16.msra.mxu0 %v1632
    %1859 = vmatprep.mubr.bf16.mxu0 %v1184
    %1860 = vmatmul.mubr.bf16.gmra.mxu0 %v1183
    %v1861 = vpop.f32.mrf.mxu0
    %v1862 = vadd.f32 %v1821, %v1861
    %v1863 = vpop.f32.mrf.mxu0
    %v1864 = vpop.f32.mrf.mxu0
    %v1865 = vadd.f32 %v1824, %v1864
    %v1866 = vpop.f32.mrf.mxu0
    %1867 = vdwg.mxu0
    %1868 = vst [vmem:[#allocation13] sm:$0xff] %v1862
    %1869 = vst [vmem:[#allocation13 + $0x8] sm:$0xff] %v1865
    // Predicated region
    $region70: #{tpu_custom_call.1} parent=1 // pred_check
      _
    $region71: #{tpu_custom_call.1} parent=1 // pred_check_branch
      %1871 = sbr.rel (0) target = $region73
    $region72: #{tpu_custom_call.1} parent=1 // pred_region
      %s1873 = ssub.s32 256, 256
      %1874 = vsyncadd [#allocation4], %s1873
      %s1875 = sshll.u32 [#allocation13], 4
      %s1876 = int_to_ptr.vmem [resolvable:$true] %s1875
      %1881 = dma.vmem_to_hbm [thread:$0]  %s1876, 256, %s11, [#allocation4], 128, 128, 8
    $region73: #{tpu_custom_call.1} parent=1 // pred_fallthru
      _
    // Predicated region
    $region74: #{tpu_custom_call.1} parent=1 // pred_check
      _
    $region75: #{tpu_custom_call.1} parent=1 // pred_check_branch
      %1883 = sbr.rel (0) target = $region77
    $region76: #{tpu_custom_call.1} parent=1 // pred_region
      %1884 = dma.done [#allocation4], 256
    $region77: #{tpu_custom_call.1} parent=1 // pred_fallthru
      _
    %1885 = vsyncpa [#allocation3], 1
    %1886 = vsyncpa [#allocation6], 1
    %1887 = vsyncpa [#allocation9], 1
    %1888 = vsyncpa [#allocation12], 1
    %1889 = vsyncpa [#allocation4], 1

</llo_original>
